<compile_context>
chip_gen: v7x
topology: tpu7x:2x2x1
jax: 0.10.0
libtpu: 0.0.40
codegen_flags: <defaults>
</compile_context>

<pallas_src>
import functools

import jax
import jax.numpy as jnp
import numpy as np
from jax.experimental import pallas as pl
from jax.experimental.pallas import tpu as pltpu

EPS = 1e-5


# ---------------------------------------------------------------------------
# Kernel
# ---------------------------------------------------------------------------
def de_basic_block_kernel(x_ref, sd_ref, su_ref, m1_ref, m2_ref, p_ref,
                          g1_ref, b1_ref, g2_ref, b2_ref, o_ref, *,
                          inv_count):
    """Whole DeBasicBlock forward in one program (problem fits in a few vregs).

    x_ref        : (N*H, W*C)   lane-dense input (NHWC flattened)
    sd_ref/su_ref: (N*H, N*H)   row-shift matrices: SD@a == a[i-1], SU@a == a[i+1]
                                with zero rows at per-image top/bottom (H padding)
    m1_ref/m2_ref: (3, W*C, W*C) banded block weight matrices, one per kh tap
    p_ref        : (W*C, W*C)   per-channel selector (sums the W lane-groups and
                                broadcasts the per-channel result back)
    g*/b*        : (1, W*C)     BN gamma / beta tiled across the W lane-groups
    o_ref        : (N*H, W*C)
    """
    x = x_ref[...]
    sd = sd_ref[...]
    su = su_ref[...]
    p = p_ref[...]

    def conv3x3(a, m_ref):
        # 3x3 "same" conv  ==  sum over kh of (H-shifted a) @ M[kh]
        up = jnp.dot(sd, a, preferred_element_type=jnp.float32)   # a[i-1]
        dn = jnp.dot(su, a, preferred_element_type=jnp.float32)   # a[i+1]
        acc = jnp.dot(up, m_ref[0], preferred_element_type=jnp.float32)
        acc = acc + jnp.dot(a, m_ref[1], preferred_element_type=jnp.float32)
        acc = acc + jnp.dot(dn, m_ref[2], preferred_element_type=jnp.float32)
        return acc

    def batch_norm(a, g_ref, b_ref):
        # Training-mode BN: biased per-channel batch stats, fused sum / sumsq.
        col_s = jnp.sum(a, axis=0, keepdims=True)        # (1, W*C)
        col_q = jnp.sum(a * a, axis=0, keepdims=True)    # (1, W*C)
        ch_s = jnp.dot(col_s, p, preferred_element_type=jnp.float32)
        ch_q = jnp.dot(col_q, p, preferred_element_type=jnp.float32)
        mean = ch_s * inv_count
        var = jnp.maximum(ch_q * inv_count - mean * mean, 0.0)
        return (a - mean) * jax.lax.rsqrt(var + EPS) * g_ref[...] + b_ref[...]

    y = jnp.maximum(batch_norm(conv3x3(x, m1_ref), g1_ref, b1_ref), 0.0)
    y = batch_norm(conv3x3(y, m2_ref), g2_ref, b2_ref)
    o_ref[...] = jnp.maximum(y + x, 0.0)      # identity residual + final ReLU


# ---------------------------------------------------------------------------
# Weight / layout preprocessing (tiny: operates on 3x3xCxC weights only)
# ---------------------------------------------------------------------------
def _deconv3x3_as_conv_hwio(w_de):
    """ConvTranspose2d(C,C,3,stride=1,padding=1) weight (Cin,Cout,3,3) ->
    equivalent Conv2d weight in HWIO (3,3,Cin,Cout): spatial flip + swap i/o."""
    return jnp.transpose(w_de[:, :, ::-1, ::-1], (2, 3, 0, 1))


def _banded_weight_matrices(w_hwio, width):
    """(3,3,Cin,Cout) -> (3, W*Cin, W*Cout) with
    M[kh, j'*Cin+ci, j*Cout+co] = w[kh, (j'-j)+1, ci, co] for |j'-j| <= 1,
    i.e. one lane-axis matmul per kh performs the +/-1 W shifts, the
    W-boundary zero padding and the channel contraction in one go."""
    kh, kw, cin, cout = w_hwio.shape
    t = np.zeros((kw, width, width), np.float32)
    for k in range(kw):
        for j in range(width):
            jp = j + (k - 1)
            if 0 <= jp < width:
                t[k, jp, j] = 1.0
    m = jnp.einsum('kab,hkio->haibo', jnp.asarray(t), w_hwio)
    return m.reshape(kh, width * cin, width * cout)


def _row_shift_matrices(n, h):
    """SD @ a == a[i-1], SU @ a == a[i+1] within each image's block of H rows,
    with zero rows at each image's top / bottom (H zero-padding for free)."""
    nh = n * h
    sd = np.zeros((nh, nh), np.float32)
    su = np.zeros((nh, nh), np.float32)
    for r in range(nh):
        if r % h != 0:
            sd[r, r - 1] = 1.0
        if r % h != h - 1:
            su[r, r + 1] = 1.0
    return jnp.asarray(sd), jnp.asarray(su)


def _channel_selector(width, c):
    """(W*C, W*C) with P[a,b] = (a % C == b % C):  colsums @ P gives the
    per-channel totals already broadcast back across the W lane-groups."""
    idx = np.arange(width * c)
    return jnp.asarray((idx[:, None] % c == idx[None, :] % c).astype(np.float32))


# ---------------------------------------------------------------------------
# Wrapper
# ---------------------------------------------------------------------------
@jax.jit
def de_basic_block(x_nchw, w_de1, g1, b1, w_de2, g2, b2):
    """x_nchw: (N,C,H,W) f32; w_de*: ConvTranspose2d weights (Cin,Cout,3,3);
    g*/b*: (C,) BatchNorm weight/bias.  stride=1, downsample=None."""
    n, c, h, w = x_nchw.shape
    nh, wc = n * h, w * c

    # NCHW -> NHWC -> (N*H, W*C): the reshape is free (contiguous) and makes
    # every in-kernel vector op / store lane-dense (W*C = 128 here).
    x2d = jnp.transpose(x_nchw, (0, 2, 3, 1)).reshape(nh, wc)

    m1 = _banded_weight_matrices(_deconv3x3_as_conv_hwio(w_de1), w)
    m2 = _banded_weight_matrices(_deconv3x3_as_conv_hwio(w_de2), w)
    sd, su = _row_shift_matrices(n, h)
    p = _channel_selector(w, c)
    g1b = jnp.tile(g1, w).reshape(1, wc)
    b1b = jnp.tile(b1, w).reshape(1, wc)
    g2b = jnp.tile(g2, w).reshape(1, wc)
    b2b = jnp.tile(b2, w).reshape(1, wc)

    kernel = functools.partial(de_basic_block_kernel,
                               inv_count=1.0 / float(n * h * w))

    # Single program, everything VMEM-resident (total ~0.5 MiB at this size).
    # TODO(synk): for real ResNet shapes (C up to 512, H/W up to 56) this
    # would need a grid + BlockSpec pipeline with a two-pass BN, and
    # "parallel" dimension semantics so v7x's two TensorCores are both used.
    out2d = pl.pallas_call(
        kernel,
        out_shape=jax.ShapeDtypeStruct((nh, wc), jnp.float32),
        in_specs=[pl.BlockSpec(memory_space=pltpu.MemorySpace.VMEM)] * 10,
        out_specs=pl.BlockSpec(memory_space=pltpu.MemorySpace.VMEM),
    )(x2d, sd, su, m1, m2, p, g1b, b1b, g2b, b2b)

    return jnp.transpose(out2d.reshape(n, h, w, c), (0, 3, 1, 2))


# ---------------------------------------------------------------------------
# Pure-JAX reference (XLA conv + training-mode BN) for verification
# ---------------------------------------------------------------------------
def reference_de_basic_block(x_nchw, w_de1, g1, b1, w_de2, g2, b2):
    x = jnp.transpose(x_nchw, (0, 2, 3, 1))
    dn = ('NHWC', 'HWIO', 'NHWC')

    def deconv(a, w_de):
        w = _deconv3x3_as_conv_hwio(w_de)
        return jax.lax.conv_general_dilated(a, w, (1, 1), ((1, 1), (1, 1)),
                                            dimension_numbers=dn)

    def bn(a, g, b):
        m = jnp.mean(a, axis=(0, 1, 2), keepdims=True)
        v = jnp.mean((a - m) ** 2, axis=(0, 1, 2), keepdims=True)
        return (a - m) * jax.lax.rsqrt(v + EPS) * g + b

    out = jax.nn.relu(bn(deconv(x, w_de1), g1, b1))
    out = bn(deconv(out, w_de2), g2, b2)
    out = jax.nn.relu(out + x)
    return jnp.transpose(out, (0, 3, 1, 2))


if __name__ == "__main__":
    # DeBasicBlock(inplanes=8, planes=8, stride=1, downsample=None)
    # TODO(synk): the stride==2 Deconv3x3 branch (output_padding=1) and the
    # optional downsample module are not implemented; module defaults used.
    N, C, H, W = 2, 8, 16, 16            # W * C == 128 -> lane-dense layout

    key = jax.random.PRNGKey(0)
    kx, k1, k2 = jax.random.split(key, 3)

    x = jax.random.normal(kx, (N, C, H, W), dtype=jnp.float32)
    # ConvTranspose2d weights, PyTorch layout (Cin, Cout, kH, kW), bias=False.
    w1 = 0.1 * jax.random.normal(k1, (C, C, 3, 3), dtype=jnp.float32)
    w2 = 0.1 * jax.random.normal(k2, (C, C, 3, 3), dtype=jnp.float32)
    # BatchNorm2d init: weight=1, bias=0.
    g1 = jnp.ones((C,), jnp.float32)
    b1 = jnp.zeros((C,), jnp.float32)
    g2 = jnp.ones((C,), jnp.float32)
    b2 = jnp.zeros((C,), jnp.float32)

    out = jax.block_until_ready(de_basic_block(x, w1, g1, b1, w2, g2, b2))
    ref = jax.block_until_ready(
        reference_de_basic_block(x, w1, g1, b1, w2, g2, b2))

    np.testing.assert_allclose(np.asarray(out), np.asarray(ref),
                               rtol=2e-2, atol=2e-2)
    print("KERNEL_OK")
</pallas_src>

<mosaic_0001>
module attributes {stable_mosaic.version = 11 : i64} {
  func.func @de_basic_block_kernel(%arg0: memref<32x128xf32, #tpu.memory_space<vmem>>, %arg1: memref<32x32xf32, #tpu.memory_space<vmem>>, %arg2: memref<32x32xf32, #tpu.memory_space<vmem>>, %arg3: memref<3x128x128xf32, #tpu.memory_space<vmem>>, %arg4: memref<3x128x128xf32, #tpu.memory_space<vmem>>, %arg5: memref<128x128xf32, #tpu.memory_space<vmem>>, %arg6: memref<1x128xf32, #tpu.memory_space<vmem>>, %arg7: memref<1x128xf32, #tpu.memory_space<vmem>>, %arg8: memref<1x128xf32, #tpu.memory_space<vmem>>, %arg9: memref<1x128xf32, #tpu.memory_space<vmem>>, %arg10: memref<32x128xf32, #tpu.memory_space<vmem>>) attributes {dimension_semantics = [], scalar_prefetch = 0 : i64, scratch_operands = 0 : i64, tpu.core_type = #tpu.core_type<tc>} {
    %c0 = arith.constant 0 : index
    %c0_0 = arith.constant 0 : index
    %0 = vector.load %arg0[%c0, %c0_0] : memref<32x128xf32, #tpu.memory_space<vmem>>, vector<32x128xf32>
    %c0_1 = arith.constant 0 : index
    %c0_2 = arith.constant 0 : index
    %1 = vector.load %arg1[%c0_1, %c0_2] : memref<32x32xf32, #tpu.memory_space<vmem>>, vector<32x32xf32>
    %c0_3 = arith.constant 0 : index
    %c0_4 = arith.constant 0 : index
    %2 = vector.load %arg2[%c0_3, %c0_4] : memref<32x32xf32, #tpu.memory_space<vmem>>, vector<32x32xf32>
    %c0_5 = arith.constant 0 : index
    %c0_6 = arith.constant 0 : index
    %3 = vector.load %arg5[%c0_5, %c0_6] : memref<128x128xf32, #tpu.memory_space<vmem>>, vector<128x128xf32>
    %cst = arith.constant dense<0.000000e+00> : vector<32x128xf32>
    %4 = tpu.matmul %1, %0, %cst {dimension_numbers = #tpu.dot_dimension_numbers<[1], [0], [0], [1], [0, 0, 1, 1], [], []>} : vector<32x32xf32>, vector<32x128xf32>, vector<32x128xf32> -> vector<32x128xf32>
    %cst_7 = arith.constant dense<0.000000e+00> : vector<32x128xf32>
    %5 = tpu.matmul %2, %0, %cst_7 {dimension_numbers = #tpu.dot_dimension_numbers<[1], [0], [0], [1], [0, 0, 1, 1], [], []>} : vector<32x32xf32>, vector<32x128xf32>, vector<32x128xf32> -> vector<32x128xf32>
    %c0_8 = arith.constant 0 : index
    %c0_9 = arith.constant 0 : index
    %c0_10 = arith.constant 0 : index
    %6 = vector.load %arg3[%c0_8, %c0_9, %c0_10] : memref<3x128x128xf32, #tpu.memory_space<vmem>>, vector<1x128x128xf32>
    %7 = vector.shape_cast %6 : vector<1x128x128xf32> to vector<128x128xf32>
    %cst_11 = arith.constant dense<0.000000e+00> : vector<32x128xf32>
    %8 = tpu.matmul %4, %7, %cst_11 {dimension_numbers = #tpu.dot_dimension_numbers<[1], [0], [0], [1], [0, 0, 1, 1], [], []>} : vector<32x128xf32>, vector<128x128xf32>, vector<32x128xf32> -> vector<32x128xf32>
    %c1 = arith.constant 1 : index
    %c0_12 = arith.constant 0 : index
    %c0_13 = arith.constant 0 : index
    %9 = vector.load %arg3[%c1, %c0_12, %c0_13] : memref<3x128x128xf32, #tpu.memory_space<vmem>>, vector<1x128x128xf32>
    %10 = vector.shape_cast %9 : vector<1x128x128xf32> to vector<128x128xf32>
    %cst_14 = arith.constant dense<0.000000e+00> : vector<32x128xf32>
    %11 = tpu.matmul %0, %10, %cst_14 {dimension_numbers = #tpu.dot_dimension_numbers<[1], [0], [0], [1], [0, 0, 1, 1], [], []>} : vector<32x128xf32>, vector<128x128xf32>, vector<32x128xf32> -> vector<32x128xf32>
    %12 = arith.addf %8, %11 : vector<32x128xf32>
    %c2 = arith.constant 2 : index
    %c0_15 = arith.constant 0 : index
    %c0_16 = arith.constant 0 : index
    %13 = vector.load %arg3[%c2, %c0_15, %c0_16] : memref<3x128x128xf32, #tpu.memory_space<vmem>>, vector<1x128x128xf32>
    %14 = vector.shape_cast %13 : vector<1x128x128xf32> to vector<128x128xf32>
    %cst_17 = arith.constant dense<0.000000e+00> : vector<32x128xf32>
    %15 = tpu.matmul %5, %14, %cst_17 {dimension_numbers = #tpu.dot_dimension_numbers<[1], [0], [0], [1], [0, 0, 1, 1], [], []>} : vector<32x128xf32>, vector<128x128xf32>, vector<32x128xf32> -> vector<32x128xf32>
    %16 = arith.addf %12, %15 : vector<32x128xf32>
    %cst_18 = arith.constant dense<0.000000e+00> : vector<128xf32>
    %17 = vector.multi_reduction <add>, %16, %cst_18 [0] : vector<32x128xf32> to vector<128xf32>
    %18 = vector.shape_cast %17 : vector<128xf32> to vector<1x128xf32>
    %19 = arith.mulf %16, %16 : vector<32x128xf32>
    %cst_19 = arith.constant dense<0.000000e+00> : vector<128xf32>
    %20 = vector.multi_reduction <add>, %19, %cst_19 [0] : vector<32x128xf32> to vector<128xf32>
    %21 = vector.shape_cast %20 : vector<128xf32> to vector<1x128xf32>
    %cst_20 = arith.constant dense<0.000000e+00> : vector<1x128xf32>
    %22 = tpu.matmul %18, %3, %cst_20 {dimension_numbers = #tpu.dot_dimension_numbers<[1], [0], [0], [1], [0, 0, 1, 1], [], []>} : vector<1x128xf32>, vector<128x128xf32>, vector<1x128xf32> -> vector<1x128xf32>
    %cst_21 = arith.constant dense<0.000000e+00> : vector<1x128xf32>
    %23 = tpu.matmul %21, %3, %cst_21 {dimension_numbers = #tpu.dot_dimension_numbers<[1], [0], [0], [1], [0, 0, 1, 1], [], []>} : vector<1x128xf32>, vector<128x128xf32>, vector<1x128xf32> -> vector<1x128xf32>
    %cst_22 = arith.constant 0.001953125 : f32
    %24 = vector.broadcast %cst_22 : f32 to vector<1x128xf32>
    %25 = arith.mulf %22, %24 : vector<1x128xf32>
    %cst_23 = arith.constant 0.001953125 : f32
    %26 = vector.broadcast %cst_23 : f32 to vector<1x128xf32>
    %27 = arith.mulf %23, %26 : vector<1x128xf32>
    %28 = arith.mulf %25, %25 : vector<1x128xf32>
    %29 = arith.subf %27, %28 : vector<1x128xf32>
    %cst_24 = arith.constant 0.000000e+00 : f32
    %30 = vector.broadcast %cst_24 : f32 to vector<1x128xf32>
    %31 = arith.maximumf %29, %30 : vector<1x128xf32>
    %32 = vector.broadcast %25 : vector<1x128xf32> to vector<32x128xf32>
    %33 = arith.subf %16, %32 : vector<32x128xf32>
    %cst_25 = arith.constant 9.99999974E-6 : f32
    %34 = vector.broadcast %cst_25 : f32 to vector<1x128xf32>
    %35 = arith.addf %31, %34 : vector<1x128xf32>
    %36 = math.rsqrt %35 : vector<1x128xf32>
    %37 = vector.broadcast %36 : vector<1x128xf32> to vector<32x128xf32>
    %38 = arith.mulf %33, %37 : vector<32x128xf32>
    %c0_26 = arith.constant 0 : index
    %c0_27 = arith.constant 0 : index
    %39 = vector.load %arg6[%c0_26, %c0_27] : memref<1x128xf32, #tpu.memory_space<vmem>>, vector<1x128xf32>
    %40 = vector.broadcast %39 : vector<1x128xf32> to vector<32x128xf32>
    %41 = arith.mulf %38, %40 : vector<32x128xf32>
    %c0_28 = arith.constant 0 : index
    %c0_29 = arith.constant 0 : index
    %42 = vector.load %arg7[%c0_28, %c0_29] : memref<1x128xf32, #tpu.memory_space<vmem>>, vector<1x128xf32>
    %43 = vector.broadcast %42 : vector<1x128xf32> to vector<32x128xf32>
    %44 = arith.addf %41, %43 : vector<32x128xf32>
    %cst_30 = arith.constant 0.000000e+00 : f32
    %45 = vector.broadcast %cst_30 : f32 to vector<32x128xf32>
    %46 = arith.maximumf %44, %45 : vector<32x128xf32>
    %cst_31 = arith.constant dense<0.000000e+00> : vector<32x128xf32>
    %47 = tpu.matmul %1, %46, %cst_31 {dimension_numbers = #tpu.dot_dimension_numbers<[1], [0], [0], [1], [0, 0, 1, 1], [], []>} : vector<32x32xf32>, vector<32x128xf32>, vector<32x128xf32> -> vector<32x128xf32>
    %cst_32 = arith.constant dense<0.000000e+00> : vector<32x128xf32>
    %48 = tpu.matmul %2, %46, %cst_32 {dimension_numbers = #tpu.dot_dimension_numbers<[1], [0], [0], [1], [0, 0, 1, 1], [], []>} : vector<32x32xf32>, vector<32x128xf32>, vector<32x128xf32> -> vector<32x128xf32>
    %c0_33 = arith.constant 0 : index
    %c0_34 = arith.constant 0 : index
    %c0_35 = arith.constant 0 : index
    %49 = vector.load %arg4[%c0_33, %c0_34, %c0_35] : memref<3x128x128xf32, #tpu.memory_space<vmem>>, vector<1x128x128xf32>
    %50 = vector.shape_cast %49 : vector<1x128x128xf32> to vector<128x128xf32>
    %cst_36 = arith.constant dense<0.000000e+00> : vector<32x128xf32>
    %51 = tpu.matmul %47, %50, %cst_36 {dimension_numbers = #tpu.dot_dimension_numbers<[1], [0], [0], [1], [0, 0, 1, 1], [], []>} : vector<32x128xf32>, vector<128x128xf32>, vector<32x128xf32> -> vector<32x128xf32>
    %c1_37 = arith.constant 1 : index
    %c0_38 = arith.constant 0 : index
    %c0_39 = arith.constant 0 : index
    %52 = vector.load %arg4[%c1_37, %c0_38, %c0_39] : memref<3x128x128xf32, #tpu.memory_space<vmem>>, vector<1x128x128xf32>
    %53 = vector.shape_cast %52 : vector<1x128x128xf32> to vector<128x128xf32>
    %cst_40 = arith.constant dense<0.000000e+00> : vector<32x128xf32>
    %54 = tpu.matmul %46, %53, %cst_40 {dimension_numbers = #tpu.dot_dimension_numbers<[1], [0], [0], [1], [0, 0, 1, 1], [], []>} : vector<32x128xf32>, vector<128x128xf32>, vector<32x128xf32> -> vector<32x128xf32>
    %55 = arith.addf %51, %54 : vector<32x128xf32>
    %c2_41 = arith.constant 2 : index
    %c0_42 = arith.constant 0 : index
    %c0_43 = arith.constant 0 : index
    %56 = vector.load %arg4[%c2_41, %c0_42, %c0_43] : memref<3x128x128xf32, #tpu.memory_space<vmem>>, vector<1x128x128xf32>
    %57 = vector.shape_cast %56 : vector<1x128x128xf32> to vector<128x128xf32>
    %cst_44 = arith.constant dense<0.000000e+00> : vector<32x128xf32>
    %58 = tpu.matmul %48, %57, %cst_44 {dimension_numbers = #tpu.dot_dimension_numbers<[1], [0], [0], [1], [0, 0, 1, 1], [], []>} : vector<32x128xf32>, vector<128x128xf32>, vector<32x128xf32> -> vector<32x128xf32>
    %59 = arith.addf %55, %58 : vector<32x128xf32>
    %cst_45 = arith.constant dense<0.000000e+00> : vector<128xf32>
    %60 = vector.multi_reduction <add>, %59, %cst_45 [0] : vector<32x128xf32> to vector<128xf32>
    %61 = vector.shape_cast %60 : vector<128xf32> to vector<1x128xf32>
    %62 = arith.mulf %59, %59 : vector<32x128xf32>
    %cst_46 = arith.constant dense<0.000000e+00> : vector<128xf32>
    %63 = vector.multi_reduction <add>, %62, %cst_46 [0] : vector<32x128xf32> to vector<128xf32>
    %64 = vector.shape_cast %63 : vector<128xf32> to vector<1x128xf32>
    %cst_47 = arith.constant dense<0.000000e+00> : vector<1x128xf32>
    %65 = tpu.matmul %61, %3, %cst_47 {dimension_numbers = #tpu.dot_dimension_numbers<[1], [0], [0], [1], [0, 0, 1, 1], [], []>} : vector<1x128xf32>, vector<128x128xf32>, vector<1x128xf32> -> vector<1x128xf32>
    %cst_48 = arith.constant dense<0.000000e+00> : vector<1x128xf32>
    %66 = tpu.matmul %64, %3, %cst_48 {dimension_numbers = #tpu.dot_dimension_numbers<[1], [0], [0], [1], [0, 0, 1, 1], [], []>} : vector<1x128xf32>, vector<128x128xf32>, vector<1x128xf32> -> vector<1x128xf32>
    %cst_49 = arith.constant 0.001953125 : f32
    %67 = vector.broadcast %cst_49 : f32 to vector<1x128xf32>
    %68 = arith.mulf %65, %67 : vector<1x128xf32>
    %cst_50 = arith.constant 0.001953125 : f32
    %69 = vector.broadcast %cst_50 : f32 to vector<1x128xf32>
    %70 = arith.mulf %66, %69 : vector<1x128xf32>
    %71 = arith.mulf %68, %68 : vector<1x128xf32>
    %72 = arith.subf %70, %71 : vector<1x128xf32>
    %cst_51 = arith.constant 0.000000e+00 : f32
    %73 = vector.broadcast %cst_51 : f32 to vector<1x128xf32>
    %74 = arith.maximumf %72, %73 : vector<1x128xf32>
    %75 = vector.broadcast %68 : vector<1x128xf32> to vector<32x128xf32>
    %76 = arith.subf %59, %75 : vector<32x128xf32>
    %cst_52 = arith.constant 9.99999974E-6 : f32
    %77 = vector.broadcast %cst_52 : f32 to vector<1x128xf32>
    %78 = arith.addf %74, %77 : vector<1x128xf32>
    %79 = math.rsqrt %78 : vector<1x128xf32>
    %80 = vector.broadcast %79 : vector<1x128xf32> to vector<32x128xf32>
    %81 = arith.mulf %76, %80 : vector<32x128xf32>
    %c0_53 = arith.constant 0 : index
    %c0_54 = arith.constant 0 : index
    %82 = vector.load %arg8[%c0_53, %c0_54] : memref<1x128xf32, #tpu.memory_space<vmem>>, vector<1x128xf32>
    %83 = vector.broadcast %82 : vector<1x128xf32> to vector<32x128xf32>
    %84 = arith.mulf %81, %83 : vector<32x128xf32>
    %c0_55 = arith.constant 0 : index
    %c0_56 = arith.constant 0 : index
    %85 = vector.load %arg9[%c0_55, %c0_56] : memref<1x128xf32, #tpu.memory_space<vmem>>, vector<1x128xf32>
    %86 = vector.broadcast %85 : vector<1x128xf32> to vector<32x128xf32>
    %87 = arith.addf %84, %86 : vector<32x128xf32>
    %88 = arith.addf %87, %0 : vector<32x128xf32>
    %cst_57 = arith.constant 0.000000e+00 : f32
    %89 = vector.broadcast %cst_57 : f32 to vector<32x128xf32>
    %90 = arith.maximumf %88, %89 : vector<32x128xf32>
    %c0_58 = arith.constant 0 : index
    %c0_59 = arith.constant 0 : index
    %91 = vector.load %arg10[%c0_58, %c0_59] : memref<32x128xf32, #tpu.memory_space<vmem>>, vector<32x128xf32>
    tpu.vector_store %arg10[%c0_58, %c0_59], %90 {strides = array<i32>} : memref<32x128xf32, #tpu.memory_space<vmem>>, vector<32x128xf32>,
    return
  }
}

</mosaic_0001>

<llo_original>
// kernel: tile.23
$region0: #{tile.23}
  #allocation0 [shape = 's32[1]{0}', space=sflag, size = 0x4, scoped, tag = 'scoped memory for tile.23']
  %s0 = inlined_call_operand.vmem [shape: f32[8], index: 0, kind: input, shape index: {}]
  %s1 = inlined_call_operand.vmem [shape: f32[16,8], index: 1, kind: output, shape index: {}]
  // Predicated region
  $region2: #{tile.23} parent=0 // pred_check
    _
  $region3: #{tile.23} parent=0 // pred_check_branch
    %3 = sbr.rel (0) target = $region5
  $region4: #{tile.23} parent=0 // pred_region
    _
  $region5: #{tile.23} parent=0 // pred_fallthru
    _
  %v4 = vld [vmem:[%s0] ss:$0 sm:$0xff]
  %5 = vst [vmem:[%s1] sm:$0xff] %v4
  %s6 = scalar_lea.vmem %s1, 8
  %7 = vst [vmem:[%s6] sm:$0xff] %v4

// kernel: tile.24
$region0: #{tile.24}
  %s0 = inlined_call_operand.vmem [shape: f32[16,8], index: 0, kind: input, shape index: {}]
  %s1 = inlined_call_operand.vmem [shape: f32[1,128], index: 1, kind: output, shape index: {}]
  $region1: #{tile.24} parent=0
    #allocation0 [shape = 'u8[4096]{0}', space=vmem, size = 0x1000, scoped, tag = 'scoped mem for output reshape']
    %v2 = vld [vmem:[%s0] sm:$0x1]
    %vm3 = vcmask 64512
    %4 = vst.msk [vmem:[#allocation0] sm:$0x1] %vm3, %v2
    %s5 = scalar_lea.vmem %s0, 15
    %v6 = vld [vmem:[%s5] sm:$0x1]
    %7 = vrot.lane.b32.xlu0 %v6, 120
    %v8 = vpop.permute.xlu0 %7
    %vm9 = vcmask 1048512
    %10 = vst.msk [vmem:[#allocation0] sm:$0x1] %vm9, %v8
    %s11 = scalar_lea.vmem %s0, 14
    %v12 = vld [vmem:[%s11] sm:$0x1]
    %13 = vrot.lane.b32.xlu0 %v12, 112
    %v14 = vpop.permute.xlu0 %13
    %vm15 = vcmask 982912
    %16 = vst.msk [vmem:[#allocation0] sm:$0x1] %vm15, %v14
    %s17 = scalar_lea.vmem %s0, 13
    %v18 = vld [vmem:[%s17] sm:$0x1]
    %19 = vrot.lane.b32.xlu0 %v18, 104
    %v20 = vpop.permute.xlu0 %19
    %vm21 = vcmask 917312
    %22 = vst.msk [vmem:[#allocation0] sm:$0x1] %vm21, %v20
    %s23 = scalar_lea.vmem %s0, 12
    %v24 = vld [vmem:[%s23] sm:$0x1]
    %25 = vrot.lane.b32.xlu0 %v24, 96
    %v26 = vpop.permute.xlu0 %25
    %vm27 = vcmask 851712
    %28 = vst.msk [vmem:[#allocation0] sm:$0x1] %vm27, %v26
    %s29 = scalar_lea.vmem %s0, 11
    %v30 = vld [vmem:[%s29] sm:$0x1]
    %31 = vrot.lane.b32.xlu0 %v30, 88
    %v32 = vpop.permute.xlu0 %31
    %vm33 = vcmask 786112
    %34 = vst.msk [vmem:[#allocation0] sm:$0x1] %vm33, %v32
    %s35 = scalar_lea.vmem %s0, 10
    %v36 = vld [vmem:[%s35] sm:$0x1]
    %37 = vrot.lane.b32.xlu0 %v36, 80
    %v38 = vpop.permute.xlu0 %37
    %vm39 = vcmask 720512
    %40 = vst.msk [vmem:[#allocation0] sm:$0x1] %vm39, %v38
    %s41 = scalar_lea.vmem %s0, 9
    %v42 = vld [vmem:[%s41] sm:$0x1]
    %43 = vrot.lane.b32.xlu0 %v42, 72
    %v44 = vpop.permute.xlu0 %43
    %vm45 = vcmask 654912
    %46 = vst.msk [vmem:[#allocation0] sm:$0x1] %vm45, %v44
    %s47 = scalar_lea.vmem %s0, 8
    %v48 = vld [vmem:[%s47] sm:$0x1]
    %49 = vrot.lane.b32.xlu0 %v48, 64
    %v50 = vpop.permute.xlu0 %49
    %vm51 = vcmask 589312
    %52 = vst.msk [vmem:[#allocation0] sm:$0x1] %vm51, %v50
    %s53 = scalar_lea.vmem %s0, 7
    %v54 = vld [vmem:[%s53] sm:$0x1]
    %55 = vrot.lane.b32.xlu0 %v54, 56
    %v56 = vpop.permute.xlu0 %55
    %vm57 = vcmask 523712
    %58 = vst.msk [vmem:[#allocation0] sm:$0x1] %vm57, %v56
    %s59 = scalar_lea.vmem %s0, 6
    %v60 = vld [vmem:[%s59] sm:$0x1]
    %61 = vrot.lane.b32.xlu0 %v60, 48
    %v62 = vpop.permute.xlu0 %61
    %vm63 = vcmask 458112
    %64 = vst.msk [vmem:[#allocation0] sm:$0x1] %vm63, %v62
    %s65 = scalar_lea.vmem %s0, 5
    %v66 = vld [vmem:[%s65] sm:$0x1]
    %67 = vrot.lane.b32.xlu0 %v66, 40
    %v68 = vpop.permute.xlu0 %67
    %vm69 = vcmask 392512
    %70 = vst.msk [vmem:[#allocation0] sm:$0x1] %vm69, %v68
    %s71 = scalar_lea.vmem %s0, 4
    %v72 = vld [vmem:[%s71] sm:$0x1]
    %73 = vrot.lane.b32.xlu0 %v72, 32
    %v74 = vpop.permute.xlu0 %73
    %vm75 = vcmask 326912
    %76 = vst.msk [vmem:[#allocation0] sm:$0x1] %vm75, %v74
    %s77 = scalar_lea.vmem %s0, 3
    %v78 = vld [vmem:[%s77] sm:$0x1]
    %79 = vrot.lane.b32.xlu0 %v78, 24
    %v80 = vpop.permute.xlu0 %79
    %vm81 = vcmask 261312
    %82 = vst.msk [vmem:[#allocation0] sm:$0x1] %vm81, %v80
    %s83 = scalar_lea.vmem %s0, 2
    %v84 = vld [vmem:[%s83] sm:$0x1]
    %85 = vrot.lane.b32.xlu0 %v84, 16
    %v86 = vpop.permute.xlu0 %85
    %vm87 = vcmask 195712
    %88 = vst.msk [vmem:[#allocation0] sm:$0x1] %vm87, %v86
    %s89 = scalar_lea.vmem %s0, 1
    %v90 = vld [vmem:[%s89] sm:$0x1]
    %91 = vrot.lane.b32.xlu0 %v90, 8
    %v92 = vpop.permute.xlu0 %91
    %vm93 = vcmask 130112
    %94 = vst.msk [vmem:[#allocation0] sm:$0x1] %vm93, %v92
    %s96 = sshllo.u32 0, 1
    %v98 = vld [vmem:[#allocation0] sm:%s96]
    %s99 = sshllo.u32 0, 1
    %100 = vst [vmem:[%s1] sm:%s99] %v98

// kernel: de_basic_block.1
$region0: #{de_basic_block.1}
  #allocation0 [shape = 'u32[]', space=smem, size = 0x4, offset = 0x4, fixed_abs, tag = 'smem constant byte address 0x4 - core index']
  #allocation1 [shape = 'u32[144,128]{1,0:T(1,128)}', space=vmem, size = 0x12000, scoped, tag = 'internal scratch']
  %s0 = inlined_call_operand.vmem [shape: f32[32,128], index: 0, kind: input, shape index: {}]
  %s1 = inlined_call_operand.vmem [shape: f32[32,32], index: 1, kind: input, shape index: {}]
  %s2 = inlined_call_operand.vmem [shape: f32[32,32], index: 2, kind: input, shape index: {}]
  %s3 = inlined_call_operand.vmem [shape: f32[3,128,128], index: 3, kind: input, shape index: {}]
  %s4 = inlined_call_operand.vmem [shape: f32[3,128,128], index: 4, kind: input, shape index: {}]
  %s5 = inlined_call_operand.vmem [shape: f32[128,128], index: 5, kind: input, shape index: {}]
  %s6 = inlined_call_operand.vmem [shape: f32[1,128], index: 6, kind: input, shape index: {}]
  %s7 = inlined_call_operand.vmem [shape: f32[1,128], index: 7, kind: input, shape index: {}]
  %s8 = inlined_call_operand.vmem [shape: f32[1,128], index: 8, kind: input, shape index: {}]
  %s9 = inlined_call_operand.vmem [shape: f32[1,128], index: 9, kind: input, shape index: {}]
  %s10 = inlined_call_operand.vmem [shape: f32[32,128], index: 10, kind: output, shape index: {}]
  %s11 = sld [smem:[#allocation0]]
  $region50: #{de_basic_block.1} parent=0
    _
  %s13 = ssub.s32 1, %s11
  %s14 = scalar_select 0, %s13, %s11
  // Predicated region
  $region2: #{de_basic_block.1} parent=0 // pred_check
    _
  $region3: #{de_basic_block.1} parent=0 // pred_check_branch
    %16 = sbr.rel (0) target = $region5
  $region4: #{de_basic_block.1} parent=0 // pred_region
    _
  $region5: #{de_basic_block.1} parent=0 // pred_fallthru
    _
  // Predicated region
  $region6: #{de_basic_block.1} parent=0 // pred_check
    _
  $region7: #{de_basic_block.1} parent=0 // pred_check_branch
    %18 = sbr.rel (0) target = $region9
  $region8: #{de_basic_block.1} parent=0 // pred_region
    _
  $region9: #{de_basic_block.1} parent=0 // pred_fallthru
    _
  // Predicated region
  $region10: #{de_basic_block.1} parent=0 // pred_check
    _
  $region11: #{de_basic_block.1} parent=0 // pred_check_branch
    %20 = sbr.rel (0) target = $region13
  $region12: #{de_basic_block.1} parent=0 // pred_region
    _
  $region13: #{de_basic_block.1} parent=0 // pred_fallthru
    _
  // Predicated region
  $region14: #{de_basic_block.1} parent=0 // pred_check
    _
  $region15: #{de_basic_block.1} parent=0 // pred_check_branch
    %22 = sbr.rel (0) target = $region17
  $region16: #{de_basic_block.1} parent=0 // pred_region
    _
  $region17: #{de_basic_block.1} parent=0 // pred_fallthru
    _
  // Predicated region
  $region18: #{de_basic_block.1} parent=0 // pred_check
    _
  $region19: #{de_basic_block.1} parent=0 // pred_check_branch
    %24 = sbr.rel (0) target = $region21
  $region20: #{de_basic_block.1} parent=0 // pred_region
    _
  $region21: #{de_basic_block.1} parent=0 // pred_fallthru
    _
  // Predicated region
  $region22: #{de_basic_block.1} parent=0 // pred_check
    _
  $region23: #{de_basic_block.1} parent=0 // pred_check_branch
    %26 = sbr.rel (0) target = $region25
  $region24: #{de_basic_block.1} parent=0 // pred_region
    _
  $region25: #{de_basic_block.1} parent=0 // pred_fallthru
    _
  // Predicated region
  $region26: #{de_basic_block.1} parent=0 // pred_check
    _
  $region27: #{de_basic_block.1} parent=0 // pred_check_branch
    %28 = sbr.rel (0) target = $region29
  $region28: #{de_basic_block.1} parent=0 // pred_region
    _
  $region29: #{de_basic_block.1} parent=0 // pred_fallthru
    _
  // Predicated region
  $region30: #{de_basic_block.1} parent=0 // pred_check
    _
  $region31: #{de_basic_block.1} parent=0 // pred_check_branch
    %30 = sbr.rel (0) target = $region33
  $region32: #{de_basic_block.1} parent=0 // pred_region
    _
  $region33: #{de_basic_block.1} parent=0 // pred_fallthru
    _
  // Predicated region
  $region34: #{de_basic_block.1} parent=0 // pred_check
    _
  $region35: #{de_basic_block.1} parent=0 // pred_check_branch
    %32 = sbr.rel (0) target = $region37
  $region36: #{de_basic_block.1} parent=0 // pred_region
    _
  $region37: #{de_basic_block.1} parent=0 // pred_fallthru
    _
  // Predicated region
  $region38: #{de_basic_block.1} parent=0 // pred_check
    _
  $region39: #{de_basic_block.1} parent=0 // pred_check_branch
    %34 = sbr.rel (0) target = $region41
  $region40: #{de_basic_block.1} parent=0 // pred_region
    _
  $region41: #{de_basic_block.1} parent=0 // pred_fallthru
    _
  %v35 = vld [vmem:[%s0] sm:$0xff]
  %v36 = vld [vmem:[%s0 + $0x8] sm:$0xff]
  %v37 = vld [vmem:[%s0 + $0x10] sm:$0xff]
  %v38 = vld [vmem:[%s0 + $0x18] sm:$0xff]
  %v39 = vld [vmem:[%s1] sm:$0xff]
  %v40 = vld [vmem:[%s1 + $0x8] sm:$0xff]
  %v41 = vld [vmem:[%s1 + $0x10] sm:$0xff]
  %v42 = vld [vmem:[%s1 + $0x18] sm:$0xff]
  %v43 = vld [vmem:[%s2] sm:$0xff]
  %v44 = vld [vmem:[%s2 + $0x8] sm:$0xff]
  %v45 = vld [vmem:[%s2 + $0x10] sm:$0xff]
  %v46 = vld [vmem:[%s2 + $0x18] sm:$0xff]
  %v47 = vld [vmem:[%s5] sm:$0xff]
  %v48 = vld [vmem:[%s5 + $0x8] sm:$0xff]
  %v49 = vld [vmem:[%s5 + $0x10] sm:$0xff]
  %v50 = vld [vmem:[%s5 + $0x18] sm:$0xff]
  %v51 = vld [vmem:[%s5 + $0x20] sm:$0xff]
  %v52 = vld [vmem:[%s5 + $0x28] sm:$0xff]
  %v53 = vld [vmem:[%s5 + $0x30] sm:$0xff]
  %v54 = vld [vmem:[%s5 + $0x38] sm:$0xff]
  %v55 = vld [vmem:[%s5 + $0x40] sm:$0xff]
  %v56 = vld [vmem:[%s5 + $0x48] sm:$0xff]
  %v57 = vld [vmem:[%s5 + $0x50] sm:$0xff]
  %v58 = vld [vmem:[%s5 + $0x58] sm:$0xff]
  %v59 = vld [vmem:[%s5 + $0x60] sm:$0xff]
  %v60 = vld [vmem:[%s5 + $0x68] sm:$0xff]
  %v61 = vld [vmem:[%s5 + $0x70] sm:$0xff]
  %v62 = vld [vmem:[%s5 + $0x78] sm:$0xff]
  %vm63 = vcmask 261120
  %v65 = vsel %vm63, %v39, 0
  %v68 = vsel %vm63, %v40, 0
  %v71 = vsel %vm63, %v41, 0
  %v74 = vsel %vm63, %v42, 0
  %76 = vmatprep.subr.mxu0 0.0
  %77 = vmatpush1.msra.mxu0 %v35
  %78 = vmatprep.subr.mxu0 0.0
  %79 = vmatpush1.msra.mxu0 %v36
  %80 = vmatprep.subr.mxu0 0.0
  %81 = vmatpush1.msra.mxu0 %v37
  %82 = vmatprep.subr.mxu0 0.0
  %83 = vmatpush1.msra.mxu0 %v38
  %84 = vmatprep.subr.mxu0 0.0
  %85 = vmatpush1.msra.mxu0 0.0
  %86 = vmatprep.subr.mxu0 0.0
  %87 = vmatpush1.msra.mxu0 0.0
  %88 = vmatprep.subr.mxu0 0.0
  %89 = vmatpush1.msra.mxu0 0.0
  %90 = vmatprep.subr.mxu0 0.0
  %91 = vmatpush1.msra.mxu0 0.0
  %92 = vmatprep.subr.mxu0 0.0
  %93 = vmatpush1.msra.mxu0 0.0
  %94 = vmatprep.subr.mxu0 0.0
  %95 = vmatpush1.msra.mxu0 0.0
  %96 = vmatprep.subr.mxu0 0.0
  %97 = vmatpush1.msra.mxu0 0.0
  %98 = vmatprep.subr.mxu0 0.0
  %99 = vmatpush1.msra.mxu0 0.0
  %100 = vmatprep.subr.mxu0 0.0
  %101 = vmatpush1.msra.mxu0 0.0
  %102 = vmatprep.subr.mxu0 0.0
  %103 = vmatpush1.msra.mxu0 0.0
  %104 = vmatprep.subr.mxu0 0.0
  %105 = vmatpush1.msra.mxu0 0.0
  %106 = vmatprep.subr.mxu0 0.0
  %107 = vmatpush1.msra.mxu0 0.0
  %108 = vmatprep.subr.mxu0 0.0
  %109 = vmatpush1.msra.mxu0 0.0
  %110 = vmatprep.subr.mxu0 0.0
  %111 = vmatpush1.msra.mxu0 0.0
  %112 = vmatprep.subr.mxu0 0.0
  %113 = vmatpush1.msra.mxu0 0.0
  %114 = vmatprep.subr.mxu0 0.0
  %115 = vmatpush1.msra.mxu0 0.0
  %116 = vmatprep.subr.mxu0 0.0
  %117 = vmatpush1.msra.mxu0 0.0
  %118 = vmatprep.subr.mxu0 0.0
  %119 = vmatpush1.msra.mxu0 0.0
  %120 = vmatprep.subr.mxu0 0.0
  %121 = vmatpush1.msra.mxu0 0.0
  %122 = vmatprep.subr.mxu0 0.0
  %123 = vmatpush1.msra.mxu0 0.0
  %124 = vmatprep.subr.mxu0 0.0
  %125 = vmatpush1.msra.mxu0 0.0
  %126 = vmatprep.subr.mxu0 0.0
  %127 = vmatpush1.msra.mxu0 0.0
  %128 = vmatprep.subr.mxu0 0.0
  %129 = vmatpush1.msra.mxu0 0.0
  %130 = vmatprep.subr.mxu0 0.0
  %131 = vmatpush1.msra.mxu0 0.0
  %132 = vmatprep.subr.mxu0 0.0
  %133 = vmatpush1.msra.mxu0 0.0
  %134 = vmatprep.subr.mxu0 0.0
  %135 = vmatpush1.msra.mxu0 0.0
  %136 = vmatprep.subr.mxu0 0.0
  %137 = vmatpush1.msra.mxu0 0.0
  %138 = vmatprep.subr.mxu0 0.0
  %139 = vmatpush1.msra.mxu0 0.0
  %140 = vmatprep.mubr.f32.mxu0 0.0
  %141 = vmatmul.mubr.f32.gmra.mrb[0].mxu0 %v65
  %v142 = vpop.f32.mrb[0].mxu0
  %v143 = vadd.f32 0.0, %v142
  %v144 = vpop.f32.mrb[0].mxu0
  %145 = vmatprep.mubr.f32.mxu0 0.0
  %146 = vmatmul.mubr.f32.gmra.mrb[0].mxu0 %v68
  %v147 = vpop.f32.mrb[0].mxu0
  %v148 = vadd.f32 0.0, %v147
  %v149 = vpop.f32.mrb[0].mxu0
  %150 = vmatprep.mubr.f32.mxu0 0.0
  %151 = vmatmul.mubr.f32.gmra.mrb[0].mxu0 %v71
  %v152 = vpop.f32.mrb[0].mxu0
  %v153 = vadd.f32 0.0, %v152
  %v154 = vpop.f32.mrb[0].mxu0
  %155 = vmatprep.mubr.f32.mxu0 0.0
  %156 = vmatmul.mubr.f32.gmra.mrb[0].mxu0 %v74
  %v157 = vpop.f32.mrb[0].mxu0
  %v158 = vadd.f32 0.0, %v157
  %v159 = vpop.f32.mrb[0].mxu0
  %160 = vdwg.mxu0
  %v162 = vsel %vm63, %v43, 0
  %v165 = vsel %vm63, %v44, 0
  %v168 = vsel %vm63, %v45, 0
  %v171 = vsel %vm63, %v46, 0
  %173 = vmatprep.subr.mxu0 0.0
  %174 = vmatpush1.msra.mxu0 %v35
  %175 = vmatprep.subr.mxu0 0.0
  %176 = vmatpush1.msra.mxu0 %v36
  %177 = vmatprep.subr.mxu0 0.0
  %178 = vmatpush1.msra.mxu0 %v37
  %179 = vmatprep.subr.mxu0 0.0
  %180 = vmatpush1.msra.mxu0 %v38
  %181 = vmatprep.subr.mxu0 0.0
  %182 = vmatpush1.msra.mxu0 0.0
  %183 = vmatprep.subr.mxu0 0.0
  %184 = vmatpush1.msra.mxu0 0.0
  %185 = vmatprep.subr.mxu0 0.0
  %186 = vmatpush1.msra.mxu0 0.0
  %187 = vmatprep.subr.mxu0 0.0
  %188 = vmatpush1.msra.mxu0 0.0
  %189 = vmatprep.subr.mxu0 0.0
  %190 = vmatpush1.msra.mxu0 0.0
  %191 = vmatprep.subr.mxu0 0.0
  %192 = vmatpush1.msra.mxu0 0.0
  %193 = vmatprep.subr.mxu0 0.0
  %194 = vmatpush1.msra.mxu0 0.0
  %195 = vmatprep.subr.mxu0 0.0
  %196 = vmatpush1.msra.mxu0 0.0
  %197 = vmatprep.subr.mxu0 0.0
  %198 = vmatpush1.msra.mxu0 0.0
  %199 = vmatprep.subr.mxu0 0.0
  %200 = vmatpush1.msra.mxu0 0.0
  %201 = vmatprep.subr.mxu0 0.0
  %202 = vmatpush1.msra.mxu0 0.0
  %203 = vmatprep.subr.mxu0 0.0
  %204 = vmatpush1.msra.mxu0 0.0
  %205 = vmatprep.subr.mxu0 0.0
  %206 = vmatpush1.msra.mxu0 0.0
  %207 = vmatprep.subr.mxu0 0.0
  %208 = vmatpush1.msra.mxu0 0.0
  %209 = vmatprep.subr.mxu0 0.0
  %210 = vmatpush1.msra.mxu0 0.0
  %211 = vmatprep.subr.mxu0 0.0
  %212 = vmatpush1.msra.mxu0 0.0
  %213 = vmatprep.subr.mxu0 0.0
  %214 = vmatpush1.msra.mxu0 0.0
  %215 = vmatprep.subr.mxu0 0.0
  %216 = vmatpush1.msra.mxu0 0.0
  %217 = vmatprep.subr.mxu0 0.0
  %218 = vmatpush1.msra.mxu0 0.0
  %219 = vmatprep.subr.mxu0 0.0
  %220 = vmatpush1.msra.mxu0 0.0
  %221 = vmatprep.subr.mxu0 0.0
  %222 = vmatpush1.msra.mxu0 0.0
  %223 = vmatprep.subr.mxu0 0.0
  %224 = vmatpush1.msra.mxu0 0.0
  %225 = vmatprep.subr.mxu0 0.0
  %226 = vmatpush1.msra.mxu0 0.0
  %227 = vmatprep.subr.mxu0 0.0
  %228 = vmatpush1.msra.mxu0 0.0
  %229 = vmatprep.subr.mxu0 0.0
  %230 = vmatpush1.msra.mxu0 0.0
  %231 = vmatprep.subr.mxu0 0.0
  %232 = vmatpush1.msra.mxu0 0.0
  %233 = vmatprep.subr.mxu0 0.0
  %234 = vmatpush1.msra.mxu0 0.0
  %235 = vmatprep.subr.mxu0 0.0
  %236 = vmatpush1.msra.mxu0 0.0
  %237 = vmatprep.mubr.f32.mxu0 0.0
  %238 = vmatmul.mubr.f32.gmra.mrb[0].mxu0 %v162
  %v239 = vpop.f32.mrb[0].mxu0
  %v240 = vadd.f32 0.0, %v239
  %v241 = vpop.f32.mrb[0].mxu0
  %242 = vmatprep.mubr.f32.mxu0 0.0
  %243 = vmatmul.mubr.f32.gmra.mrb[0].mxu0 %v165
  %v244 = vpop.f32.mrb[0].mxu0
  %v245 = vadd.f32 0.0, %v244
  %v246 = vpop.f32.mrb[0].mxu0
  %247 = vmatprep.mubr.f32.mxu0 0.0
  %248 = vmatmul.mubr.f32.gmra.mrb[0].mxu0 %v168
  %v249 = vpop.f32.mrb[0].mxu0
  %v250 = vadd.f32 0.0, %v249
  %v251 = vpop.f32.mrb[0].mxu0
  %252 = vmatprep.mubr.f32.mxu0 0.0
  %253 = vmatmul.mubr.f32.gmra.mrb[0].mxu0 %v171
  %v254 = vpop.f32.mrb[0].mxu0
  %v255 = vadd.f32 0.0, %v254
  %v256 = vpop.f32.mrb[0].mxu0
  %257 = vdwg.mxu0
  %v258 = vld [vmem:[%s3] sm:$0xff]
  %v259 = vld [vmem:[%s3 + $0x8] sm:$0xff]
  %v260 = vld [vmem:[%s3 + $0x10] sm:$0xff]
  %v261 = vld [vmem:[%s3 + $0x18] sm:$0xff]
  %v262 = vld [vmem:[%s3 + $0x20] sm:$0xff]
  %v263 = vld [vmem:[%s3 + $0x28] sm:$0xff]
  %v264 = vld [vmem:[%s3 + $0x30] sm:$0xff]
  %v265 = vld [vmem:[%s3 + $0x38] sm:$0xff]
  %v266 = vld [vmem:[%s3 + $0x40] sm:$0xff]
  %v267 = vld [vmem:[%s3 + $0x48] sm:$0xff]
  %v268 = vld [vmem:[%s3 + $0x50] sm:$0xff]
  %v269 = vld [vmem:[%s3 + $0x58] sm:$0xff]
  %v270 = vld [vmem:[%s3 + $0x60] sm:$0xff]
  %v271 = vld [vmem:[%s3 + $0x68] sm:$0xff]
  %v272 = vld [vmem:[%s3 + $0x70] sm:$0xff]
  %v273 = vld [vmem:[%s3 + $0x78] sm:$0xff]
  %s274 = scalar_lea.vmem %s3, 128
  %v275 = vld [vmem:[%s274] sm:$0xff]
  %v276 = vld [vmem:[%s274 + $0x8] sm:$0xff]
  %v277 = vld [vmem:[%s274 + $0x10] sm:$0xff]
  %v278 = vld [vmem:[%s274 + $0x18] sm:$0xff]
  %v279 = vld [vmem:[%s274 + $0x20] sm:$0xff]
  %v280 = vld [vmem:[%s274 + $0x28] sm:$0xff]
  %v281 = vld [vmem:[%s274 + $0x30] sm:$0xff]
  %v282 = vld [vmem:[%s274 + $0x38] sm:$0xff]
  %v283 = vld [vmem:[%s274 + $0x40] sm:$0xff]
  %v284 = vld [vmem:[%s274 + $0x48] sm:$0xff]
  %v285 = vld [vmem:[%s274 + $0x50] sm:$0xff]
  %v286 = vld [vmem:[%s274 + $0x58] sm:$0xff]
  %v287 = vld [vmem:[%s274 + $0x60] sm:$0xff]
  %v288 = vld [vmem:[%s274 + $0x68] sm:$0xff]
  %v289 = vld [vmem:[%s274 + $0x70] sm:$0xff]
  %v290 = vld [vmem:[%s274 + $0x78] sm:$0xff]
  %291 = vmatprep.subr.mxu0 0.0
  %292 = vmatpush1.msra.mxu0 %v275
  %293 = vmatprep.subr.mxu0 0.0
  %294 = vmatpush1.msra.mxu0 %v276
  %295 = vmatprep.subr.mxu0 0.0
  %296 = vmatpush1.msra.mxu0 %v277
  %297 = vmatprep.subr.mxu0 0.0
  %298 = vmatpush1.msra.mxu0 %v278
  %299 = vmatprep.subr.mxu0 0.0
  %300 = vmatpush1.msra.mxu0 %v279
  %301 = vmatprep.subr.mxu0 0.0
  %302 = vmatpush1.msra.mxu0 %v280
  %303 = vmatprep.subr.mxu0 0.0
  %304 = vmatpush1.msra.mxu0 %v281
  %305 = vmatprep.subr.mxu0 0.0
  %306 = vmatpush1.msra.mxu0 %v282
  %307 = vmatprep.subr.mxu0 0.0
  %308 = vmatpush1.msra.mxu0 %v283
  %309 = vmatprep.subr.mxu0 0.0
  %310 = vmatpush1.msra.mxu0 %v284
  %311 = vmatprep.subr.mxu0 0.0
  %312 = vmatpush1.msra.mxu0 %v285
  %313 = vmatprep.subr.mxu0 0.0
  %314 = vmatpush1.msra.mxu0 %v286
  %315 = vmatprep.subr.mxu0 0.0
  %316 = vmatpush1.msra.mxu0 %v287
  %317 = vmatprep.subr.mxu0 0.0
  %318 = vmatpush1.msra.mxu0 %v288
  %319 = vmatprep.subr.mxu0 0.0
  %320 = vmatpush1.msra.mxu0 %v289
  %321 = vmatprep.subr.mxu0 0.0
  %322 = vmatpush1.msra.mxu0 %v290
  %323 = vmatprep.subr.mxu0 0.0
  %324 = vmatpush1.msra.mxu0 0.0
  %325 = vmatprep.subr.mxu0 0.0
  %326 = vmatpush1.msra.mxu0 0.0
  %327 = vmatprep.subr.mxu0 0.0
  %328 = vmatpush1.msra.mxu0 0.0
  %329 = vmatprep.subr.mxu0 0.0
  %330 = vmatpush1.msra.mxu0 0.0
  %331 = vmatprep.subr.mxu0 0.0
  %332 = vmatpush1.msra.mxu0 0.0
  %333 = vmatprep.subr.mxu0 0.0
  %334 = vmatpush1.msra.mxu0 0.0
  %335 = vmatprep.subr.mxu0 0.0
  %336 = vmatpush1.msra.mxu0 0.0
  %337 = vmatprep.subr.mxu0 0.0
  %338 = vmatpush1.msra.mxu0 0.0
  %339 = vmatprep.subr.mxu0 0.0
  %340 = vmatpush1.msra.mxu0 0.0
  %341 = vmatprep.subr.mxu0 0.0
  %342 = vmatpush1.msra.mxu0 0.0
  %343 = vmatprep.subr.mxu0 0.0
  %344 = vmatpush1.msra.mxu0 0.0
  %345 = vmatprep.subr.mxu0 0.0
  %346 = vmatpush1.msra.mxu0 0.0
  %347 = vmatprep.subr.mxu0 0.0
  %348 = vmatpush1.msra.mxu0 0.0
  %349 = vmatprep.subr.mxu0 0.0
  %350 = vmatpush1.msra.mxu0 0.0
  %351 = vmatprep.subr.mxu0 0.0
  %352 = vmatpush1.msra.mxu0 0.0
  %353 = vmatprep.subr.mxu0 0.0
  %354 = vmatpush1.msra.mxu0 0.0
  %355 = vmatprep.mubr.f32.mxu0 0.0
  %356 = vmatmul.mubr.f32.gmra.mrb[0].mxu0 %v35
  %v357 = vpop.f32.mrb[0].mxu0
  %v358 = vadd.f32 0.0, %v357
  %v359 = vpop.f32.mrb[0].mxu0
  %360 = vmatprep.mubr.f32.mxu0 0.0
  %361 = vmatmul.mubr.f32.gmra.mrb[0].mxu0 %v36
  %v362 = vpop.f32.mrb[0].mxu0
  %v363 = vadd.f32 0.0, %v362
  %v364 = vpop.f32.mrb[0].mxu0
  %365 = vmatprep.mubr.f32.mxu0 0.0
  %366 = vmatmul.mubr.f32.gmra.mrb[0].mxu0 %v37
  %v367 = vpop.f32.mrb[0].mxu0
  %v368 = vadd.f32 0.0, %v367
  %v369 = vpop.f32.mrb[0].mxu0
  %370 = vmatprep.mubr.f32.mxu0 0.0
  %371 = vmatmul.mubr.f32.gmra.mrb[0].mxu0 %v38
  %v372 = vpop.f32.mrb[0].mxu0
  %v373 = vadd.f32 0.0, %v372
  %v374 = vpop.f32.mrb[0].mxu0
  %375 = vdwg.mxu0
  %376 = vmatprep.subr.mxu0 0.0
  %377 = vmatpush1.msra.mxu0 %v258
  %378 = vmatprep.subr.mxu0 0.0
  %379 = vmatpush1.msra.mxu0 %v259
  %380 = vmatprep.subr.mxu0 0.0
  %381 = vmatpush1.msra.mxu0 %v260
  %382 = vmatprep.subr.mxu0 0.0
  %383 = vmatpush1.msra.mxu0 %v261
  %384 = vmatprep.subr.mxu0 0.0
  %385 = vmatpush1.msra.mxu0 %v262
  %386 = vmatprep.subr.mxu0 0.0
  %387 = vmatpush1.msra.mxu0 %v263
  %388 = vmatprep.subr.mxu0 0.0
  %389 = vmatpush1.msra.mxu0 %v264
  %390 = vmatprep.subr.mxu0 0.0
  %391 = vmatpush1.msra.mxu0 %v265
  %392 = vmatprep.subr.mxu0 0.0
  %393 = vmatpush1.msra.mxu0 %v266
  %394 = vmatprep.subr.mxu0 0.0
  %395 = vmatpush1.msra.mxu0 %v267
  %396 = vmatprep.subr.mxu0 0.0
  %397 = vmatpush1.msra.mxu0 %v268
  %398 = vmatprep.subr.mxu0 0.0
  %399 = vmatpush1.msra.mxu0 %v269
  %400 = vmatprep.subr.mxu0 0.0
  %401 = vmatpush1.msra.mxu0 %v270
  %402 = vmatprep.subr.mxu0 0.0
  %403 = vmatpush1.msra.mxu0 %v271
  %404 = vmatprep.subr.mxu0 0.0
  %405 = vmatpush1.msra.mxu0 %v272
  %406 = vmatprep.subr.mxu0 0.0
  %407 = vmatpush1.msra.mxu0 %v273
  %408 = vmatprep.subr.mxu0 0.0
  %409 = vmatpush1.msra.mxu0 0.0
  %410 = vmatprep.subr.mxu0 0.0
  %411 = vmatpush1.msra.mxu0 0.0
  %412 = vmatprep.subr.mxu0 0.0
  %413 = vmatpush1.msra.mxu0 0.0
  %414 = vmatprep.subr.mxu0 0.0
  %415 = vmatpush1.msra.mxu0 0.0
  %416 = vmatprep.subr.mxu0 0.0
  %417 = vmatpush1.msra.mxu0 0.0
  %418 = vmatprep.subr.mxu0 0.0
  %419 = vmatpush1.msra.mxu0 0.0
  %420 = vmatprep.subr.mxu0 0.0
  %421 = vmatpush1.msra.mxu0 0.0
  %422 = vmatprep.subr.mxu0 0.0
  %423 = vmatpush1.msra.mxu0 0.0
  %424 = vmatprep.subr.mxu0 0.0
  %425 = vmatpush1.msra.mxu0 0.0
  %426 = vmatprep.subr.mxu0 0.0
  %427 = vmatpush1.msra.mxu0 0.0
  %428 = vmatprep.subr.mxu0 0.0
  %429 = vmatpush1.msra.mxu0 0.0
  %430 = vmatprep.subr.mxu0 0.0
  %431 = vmatpush1.msra.mxu0 0.0
  %432 = vmatprep.subr.mxu0 0.0
  %433 = vmatpush1.msra.mxu0 0.0
  %434 = vmatprep.subr.mxu0 0.0
  %435 = vmatpush1.msra.mxu0 0.0
  %436 = vmatprep.subr.mxu0 0.0
  %437 = vmatpush1.msra.mxu0 0.0
  %438 = vmatprep.subr.mxu0 0.0
  %439 = vmatpush1.msra.mxu0 0.0
  %440 = vmatprep.mubr.f32.mxu0 0.0
  %441 = vmatmul.mubr.f32.gmra.mrb[0].mxu0 %v143
  %v442 = vpop.f32.mrb[0].mxu0
  %v443 = vadd.f32 %v358, %v442
  %v444 = vpop.f32.mrb[0].mxu0
  %445 = vmatprep.mubr.f32.mxu0 0.0
  %446 = vmatmul.mubr.f32.gmra.mrb[0].mxu0 %v148
  %v447 = vpop.f32.mrb[0].mxu0
  %v448 = vadd.f32 %v363, %v447
  %v449 = vpop.f32.mrb[0].mxu0
  %450 = vmatprep.mubr.f32.mxu0 0.0
  %451 = vmatmul.mubr.f32.gmra.mrb[0].mxu0 %v153
  %v452 = vpop.f32.mrb[0].mxu0
  %v453 = vadd.f32 %v368, %v452
  %v454 = vpop.f32.mrb[0].mxu0
  %455 = vmatprep.mubr.f32.mxu0 0.0
  %456 = vmatmul.mubr.f32.gmra.mrb[0].mxu0 %v158
  %v457 = vpop.f32.mrb[0].mxu0
  %v458 = vadd.f32 %v373, %v457
  %v459 = vpop.f32.mrb[0].mxu0
  %460 = vdwg.mxu0
  %s461 = scalar_lea.vmem %s3, 256
  %v462 = vld [vmem:[%s461] sm:$0xff]
  %v463 = vld [vmem:[%s461 + $0x8] sm:$0xff]
  %v464 = vld [vmem:[%s461 + $0x10] sm:$0xff]
  %v465 = vld [vmem:[%s461 + $0x18] sm:$0xff]
  %v466 = vld [vmem:[%s461 + $0x20] sm:$0xff]
  %v467 = vld [vmem:[%s461 + $0x28] sm:$0xff]
  %v468 = vld [vmem:[%s461 + $0x30] sm:$0xff]
  %v469 = vld [vmem:[%s461 + $0x38] sm:$0xff]
  %v470 = vld [vmem:[%s461 + $0x40] sm:$0xff]
  %v471 = vld [vmem:[%s461 + $0x48] sm:$0xff]
  %v472 = vld [vmem:[%s461 + $0x50] sm:$0xff]
  %v473 = vld [vmem:[%s461 + $0x58] sm:$0xff]
  %v474 = vld [vmem:[%s461 + $0x60] sm:$0xff]
  %v475 = vld [vmem:[%s461 + $0x68] sm:$0xff]
  %v476 = vld [vmem:[%s461 + $0x70] sm:$0xff]
  %v477 = vld [vmem:[%s461 + $0x78] sm:$0xff]
  %478 = vmatprep.subr.mxu0 0.0
  %479 = vmatpush1.msra.mxu0 %v462
  %480 = vmatprep.subr.mxu0 0.0
  %481 = vmatpush1.msra.mxu0 %v463
  %482 = vmatprep.subr.mxu0 0.0
  %483 = vmatpush1.msra.mxu0 %v464
  %484 = vmatprep.subr.mxu0 0.0
  %485 = vmatpush1.msra.mxu0 %v465
  %486 = vmatprep.subr.mxu0 0.0
  %487 = vmatpush1.msra.mxu0 %v466
  %488 = vmatprep.subr.mxu0 0.0
  %489 = vmatpush1.msra.mxu0 %v467
  %490 = vmatprep.subr.mxu0 0.0
  %491 = vmatpush1.msra.mxu0 %v468
  %492 = vmatprep.subr.mxu0 0.0
  %493 = vmatpush1.msra.mxu0 %v469
  %494 = vmatprep.subr.mxu0 0.0
  %495 = vmatpush1.msra.mxu0 %v470
  %496 = vmatprep.subr.mxu0 0.0
  %497 = vmatpush1.msra.mxu0 %v471
  %498 = vmatprep.subr.mxu0 0.0
  %499 = vmatpush1.msra.mxu0 %v472
  %500 = vmatprep.subr.mxu0 0.0
  %501 = vmatpush1.msra.mxu0 %v473
  %502 = vmatprep.subr.mxu0 0.0
  %503 = vmatpush1.msra.mxu0 %v474
  %504 = vmatprep.subr.mxu0 0.0
  %505 = vmatpush1.msra.mxu0 %v475
  %506 = vmatprep.subr.mxu0 0.0
  %507 = vmatpush1.msra.mxu0 %v476
  %508 = vmatprep.subr.mxu0 0.0
  %509 = vmatpush1.msra.mxu0 %v477
  %510 = vmatprep.subr.mxu0 0.0
  %511 = vmatpush1.msra.mxu0 0.0
  %512 = vmatprep.subr.mxu0 0.0
  %513 = vmatpush1.msra.mxu0 0.0
  %514 = vmatprep.subr.mxu0 0.0
  %515 = vmatpush1.msra.mxu0 0.0
  %516 = vmatprep.subr.mxu0 0.0
  %517 = vmatpush1.msra.mxu0 0.0
  %518 = vmatprep.subr.mxu0 0.0
  %519 = vmatpush1.msra.mxu0 0.0
  %520 = vmatprep.subr.mxu0 0.0
  %521 = vmatpush1.msra.mxu0 0.0
  %522 = vmatprep.subr.mxu0 0.0
  %523 = vmatpush1.msra.mxu0 0.0
  %524 = vmatprep.subr.mxu0 0.0
  %525 = vmatpush1.msra.mxu0 0.0
  %526 = vmatprep.subr.mxu0 0.0
  %527 = vmatpush1.msra.mxu0 0.0
  %528 = vmatprep.subr.mxu0 0.0
  %529 = vmatpush1.msra.mxu0 0.0
  %530 = vmatprep.subr.mxu0 0.0
  %531 = vmatpush1.msra.mxu0 0.0
  %532 = vmatprep.subr.mxu0 0.0
  %533 = vmatpush1.msra.mxu0 0.0
  %534 = vmatprep.subr.mxu0 0.0
  %535 = vmatpush1.msra.mxu0 0.0
  %536 = vmatprep.subr.mxu0 0.0
  %537 = vmatpush1.msra.mxu0 0.0
  %538 = vmatprep.subr.mxu0 0.0
  %539 = vmatpush1.msra.mxu0 0.0
  %540 = vmatprep.subr.mxu0 0.0
  %541 = vmatpush1.msra.mxu0 0.0
  %542 = vmatprep.mubr.f32.mxu0 0.0
  %543 = vmatmul.mubr.f32.gmra.mrb[0].mxu0 %v240
  %v544 = vpop.f32.mrb[0].mxu0
  %v545 = vadd.f32 0.0, %v544
  %v546 = vpop.f32.mrb[0].mxu0
  %547 = vmatprep.mubr.f32.mxu0 0.0
  %548 = vmatmul.mubr.f32.gmra.mrb[0].mxu0 %v245
  %v549 = vpop.f32.mrb[0].mxu0
  %v550 = vadd.f32 0.0, %v549
  %v551 = vpop.f32.mrb[0].mxu0
  %552 = vmatprep.mubr.f32.mxu0 0.0
  %553 = vmatmul.mubr.f32.gmra.mrb[0].mxu0 %v250
  %v554 = vpop.f32.mrb[0].mxu0
  %v555 = vadd.f32 0.0, %v554
  %v556 = vpop.f32.mrb[0].mxu0
  %557 = vmatprep.mubr.f32.mxu0 0.0
  %558 = vmatmul.mubr.f32.gmra.mrb[0].mxu0 %v255
  %v559 = vpop.f32.mrb[0].mxu0
  %v560 = vadd.f32 0.0, %v559
  %v561 = vpop.f32.mrb[0].mxu0
  %562 = vdwg.mxu0
  %v563 = vadd.f32 %v443, %v545
  %v564 = vadd.f32 %v448, %v550
  %v565 = vadd.f32 %v453, %v555
  %v566 = vadd.f32 %v458, %v560
  %v567 = vadd.f32 %v563, %v564
  %v568 = vadd.f32 %v567, %v565
  %v569 = vadd.f32 %v568, %v566
  %v570 = vrot.slane %v569, 4
  %v571 = vadd.f32 %v569, %v570
  %v572 = vrot.slane %v571, 2
  %v573 = vadd.f32 %v571, %v572
  %v574 = vrot.slane %v573, 1
  %v575 = vadd.f32 %v573, %v574
  %v576 = vmul.f32 %v563, %v563
  %v577 = vmul.f32 %v564, %v564
  %v578 = vmul.f32 %v565, %v565
  %v579 = vmul.f32 %v566, %v566
  %v580 = vadd.f32 %v576, %v577
  %v581 = vadd.f32 %v580, %v578
  %v582 = vadd.f32 %v581, %v579
  %v583 = vrot.slane %v582, 4
  %v584 = vadd.f32 %v582, %v583
  %v585 = vrot.slane %v584, 2
  %v586 = vadd.f32 %v584, %v585
  %v587 = vrot.slane %v586, 1
  %v588 = vadd.f32 %v586, %v587
  %589 = vmatprep.subr.mxu0 0.0
  %590 = vmatpush1.msra.mxu0 %v47
  %591 = vmatprep.subr.mxu0 0.0
  %592 = vmatpush1.msra.mxu0 %v48
  %593 = vmatprep.subr.mxu0 0.0
  %594 = vmatpush1.msra.mxu0 %v49
  %595 = vmatprep.subr.mxu0 0.0
  %596 = vmatpush1.msra.mxu0 %v50
  %597 = vmatprep.subr.mxu0 0.0
  %598 = vmatpush1.msra.mxu0 %v51
  %599 = vmatprep.subr.mxu0 0.0
  %600 = vmatpush1.msra.mxu0 %v52
  %601 = vmatprep.subr.mxu0 0.0
  %602 = vmatpush1.msra.mxu0 %v53
  %603 = vmatprep.subr.mxu0 0.0
  %604 = vmatpush1.msra.mxu0 %v54
  %605 = vmatprep.subr.mxu0 0.0
  %606 = vmatpush1.msra.mxu0 %v55
  %607 = vmatprep.subr.mxu0 0.0
  %608 = vmatpush1.msra.mxu0 %v56
  %609 = vmatprep.subr.mxu0 0.0
  %610 = vmatpush1.msra.mxu0 %v57
  %611 = vmatprep.subr.mxu0 0.0
  %612 = vmatpush1.msra.mxu0 %v58
  %613 = vmatprep.subr.mxu0 0.0
  %614 = vmatpush1.msra.mxu0 %v59
  %615 = vmatprep.subr.mxu0 0.0
  %616 = vmatpush1.msra.mxu0 %v60
  %617 = vmatprep.subr.mxu0 0.0
  %618 = vmatpush1.msra.mxu0 %v61
  %619 = vmatprep.subr.mxu0 0.0
  %620 = vmatpush1.msra.mxu0 %v62
  %621 = vmatprep.subr.mxu0 0.0
  %622 = vmatpush1.msra.mxu0 0.0
  %623 = vmatprep.subr.mxu0 0.0
  %624 = vmatpush1.msra.mxu0 0.0
  %625 = vmatprep.subr.mxu0 0.0
  %626 = vmatpush1.msra.mxu0 0.0
  %627 = vmatprep.subr.mxu0 0.0
  %628 = vmatpush1.msra.mxu0 0.0
  %629 = vmatprep.subr.mxu0 0.0
  %630 = vmatpush1.msra.mxu0 0.0
  %631 = vmatprep.subr.mxu0 0.0
  %632 = vmatpush1.msra.mxu0 0.0
  %633 = vmatprep.subr.mxu0 0.0
  %634 = vmatpush1.msra.mxu0 0.0
  %635 = vmatprep.subr.mxu0 0.0
  %636 = vmatpush1.msra.mxu0 0.0
  %637 = vmatprep.subr.mxu0 0.0
  %638 = vmatpush1.msra.mxu0 0.0
  %639 = vmatprep.subr.mxu0 0.0
  %640 = vmatpush1.msra.mxu0 0.0
  %641 = vmatprep.subr.mxu0 0.0
  %642 = vmatpush1.msra.mxu0 0.0
  %643 = vmatprep.subr.mxu0 0.0
  %644 = vmatpush1.msra.mxu0 0.0
  %645 = vmatprep.subr.mxu0 0.0
  %646 = vmatpush1.msra.mxu0 0.0
  %647 = vmatprep.subr.mxu0 0.0
  %648 = vmatpush1.msra.mxu0 0.0
  %649 = vmatprep.subr.mxu0 0.0
  %650 = vmatpush1.msra.mxu0 0.0
  %651 = vmatprep.subr.mxu0 0.0
  %652 = vmatpush1.msra.mxu0 0.0
  %653 = vmatprep.mubr.f32.mxu0 0.0
  %654 = vmatmul.mubr.f32.gmra.mrb[0].mxu0 %v575
  %v655 = vpop.f32.mrb[0].mxu0
  %v656 = vadd.f32 0.0, %v655
  %v657 = vpop.f32.mrb[0].mxu0
  %658 = vdwg.mxu0
  %659 = vmatprep.subr.mxu0 0.0
  %660 = vmatpush1.msra.mxu0 %v47
  %661 = vmatprep.subr.mxu0 0.0
  %662 = vmatpush1.msra.mxu0 %v48
  %663 = vmatprep.subr.mxu0 0.0
  %664 = vmatpush1.msra.mxu0 %v49
  %665 = vmatprep.subr.mxu0 0.0
  %666 = vmatpush1.msra.mxu0 %v50
  %667 = vmatprep.subr.mxu0 0.0
  %668 = vmatpush1.msra.mxu0 %v51
  %669 = vmatprep.subr.mxu0 0.0
  %670 = vmatpush1.msra.mxu0 %v52
  %671 = vmatprep.subr.mxu0 0.0
  %672 = vmatpush1.msra.mxu0 %v53
  %673 = vmatprep.subr.mxu0 0.0
  %674 = vmatpush1.msra.mxu0 %v54
  %675 = vmatprep.subr.mxu0 0.0
  %676 = vmatpush1.msra.mxu0 %v55
  %677 = vmatprep.subr.mxu0 0.0
  %678 = vmatpush1.msra.mxu0 %v56
  %679 = vmatprep.subr.mxu0 0.0
  %680 = vmatpush1.msra.mxu0 %v57
  %681 = vmatprep.subr.mxu0 0.0
  %682 = vmatpush1.msra.mxu0 %v58
  %683 = vmatprep.subr.mxu0 0.0
  %684 = vmatpush1.msra.mxu0 %v59
  %685 = vmatprep.subr.mxu0 0.0
  %686 = vmatpush1.msra.mxu0 %v60
  %687 = vmatprep.subr.mxu0 0.0
  %688 = vmatpush1.msra.mxu0 %v61
  %689 = vmatprep.subr.mxu0 0.0
  %690 = vmatpush1.msra.mxu0 %v62
  %691 = vmatprep.subr.mxu0 0.0
  %692 = vmatpush1.msra.mxu0 0.0
  %693 = vmatprep.subr.mxu0 0.0
  %694 = vmatpush1.msra.mxu0 0.0
  %695 = vmatprep.subr.mxu0 0.0
  %696 = vmatpush1.msra.mxu0 0.0
  %697 = vmatprep.subr.mxu0 0.0
  %698 = vmatpush1.msra.mxu0 0.0
  %699 = vmatprep.subr.mxu0 0.0
  %700 = vmatpush1.msra.mxu0 0.0
  %701 = vmatprep.subr.mxu0 0.0
  %702 = vmatpush1.msra.mxu0 0.0
  %703 = vmatprep.subr.mxu0 0.0
  %704 = vmatpush1.msra.mxu0 0.0
  %705 = vmatprep.subr.mxu0 0.0
  %706 = vmatpush1.msra.mxu0 0.0
  %707 = vmatprep.subr.mxu0 0.0
  %708 = vmatpush1.msra.mxu0 0.0
  %709 = vmatprep.subr.mxu0 0.0
  %710 = vmatpush1.msra.mxu0 0.0
  %711 = vmatprep.subr.mxu0 0.0
  %712 = vmatpush1.msra.mxu0 0.0
  %713 = vmatprep.subr.mxu0 0.0
  %714 = vmatpush1.msra.mxu0 0.0
  %715 = vmatprep.subr.mxu0 0.0
  %716 = vmatpush1.msra.mxu0 0.0
  %717 = vmatprep.subr.mxu0 0.0
  %718 = vmatpush1.msra.mxu0 0.0
  %719 = vmatprep.subr.mxu0 0.0
  %720 = vmatpush1.msra.mxu0 0.0
  %721 = vmatprep.subr.mxu0 0.0
  %722 = vmatpush1.msra.mxu0 0.0
  %723 = vmatprep.mubr.f32.mxu0 0.0
  %724 = vmatmul.mubr.f32.gmra.mrb[0].mxu0 %v588
  %v725 = vpop.f32.mrb[0].mxu0
  %v726 = vadd.f32 0.0, %v725
  %v727 = vpop.f32.mrb[0].mxu0
  %728 = vdwg.mxu0
  %v729 = vmul.f32 %v656, 0.001953125
  %v730 = vmul.f32 %v726, 0.001953125
  %v731 = vmul.f32 %v729, %v729
  %v732 = vsub.f32 %v730, %v731
  %v733 = vmax.f32 %v732, 0.0
  %v734 = vlaneseq
  %v735 = vshrl.u32 %v734, 7
  %v736 = vsub.s32 0, %v735
  %v737 = vrot.slane %v729, %v736
  %v738 = vsub.f32 %v563, %v737
  %v739 = vsub.f32 %v564, %v737
  %v740 = vsub.f32 %v565, %v737
  %v741 = vsub.f32 %v566, %v737
  %v742 = vadd.f32 %v733, 1e-05
  %v743 = vrsqrt.pop %v742
  %v744 = vlaneseq
  %v745 = vshrl.u32 %v744, 7
  %v746 = vsub.s32 0, %v745
  %v747 = vrot.slane %v743, %v746
  %v748 = vmul.f32 %v738, %v747
  %v749 = vmul.f32 %v739, %v747
  %v750 = vmul.f32 %v740, %v747
  %v751 = vmul.f32 %v741, %v747
  %v752 = vld [vmem:[%s6] sm:$0x1]
  %v754 = vlaneseq
  %v755 = vshrl.u32 %v754, 7
  %v756 = vsub.s32 0, %v755
  %v757 = vrot.slane %v752, %v756
  %v759 = vmul.f32 %v748, %v757
  %v760 = vmul.f32 %v749, %v757
  %v761 = vmul.f32 %v750, %v757
  %v762 = vmul.f32 %v751, %v757
  %v763 = vld [vmem:[%s7] sm:$0x1]
  %v765 = vlaneseq
  %v766 = vshrl.u32 %v765, 7
  %v767 = vsub.s32 0, %v766
  %v768 = vrot.slane %v763, %v767
  %v770 = vadd.f32 %v759, %v768
  %v771 = vadd.f32 %v760, %v768
  %v772 = vadd.f32 %v761, %v768
  %v773 = vadd.f32 %v762, %v768
  %v774 = vmax.f32 %v770, 0.0
  %v775 = vmax.f32 %v771, 0.0
  %v776 = vmax.f32 %v772, 0.0
  %v777 = vmax.f32 %v773, 0.0
  %778 = vmatprep.subr.mxu0 0.0
  %779 = vmatpush1.msra.mxu0 %v774
  %780 = vmatprep.subr.mxu0 0.0
  %781 = vmatpush1.msra.mxu0 %v775
  %782 = vmatprep.subr.mxu0 0.0
  %783 = vmatpush1.msra.mxu0 %v776
  %784 = vmatprep.subr.mxu0 0.0
  %785 = vmatpush1.msra.mxu0 %v777
  %786 = vmatprep.subr.mxu0 0.0
  %787 = vmatpush1.msra.mxu0 0.0
  %788 = vmatprep.subr.mxu0 0.0
  %789 = vmatpush1.msra.mxu0 0.0
  %790 = vmatprep.subr.mxu0 0.0
  %791 = vmatpush1.msra.mxu0 0.0
  %792 = vmatprep.subr.mxu0 0.0
  %793 = vmatpush1.msra.mxu0 0.0
  %794 = vmatprep.subr.mxu0 0.0
  %795 = vmatpush1.msra.mxu0 0.0
  %796 = vmatprep.subr.mxu0 0.0
  %797 = vmatpush1.msra.mxu0 0.0
  %798 = vmatprep.subr.mxu0 0.0
  %799 = vmatpush1.msra.mxu0 0.0
  %800 = vmatprep.subr.mxu0 0.0
  %801 = vmatpush1.msra.mxu0 0.0
  %802 = vmatprep.subr.mxu0 0.0
  %803 = vmatpush1.msra.mxu0 0.0
  %804 = vmatprep.subr.mxu0 0.0
  %805 = vmatpush1.msra.mxu0 0.0
  %806 = vmatprep.subr.mxu0 0.0
  %807 = vmatpush1.msra.mxu0 0.0
  %808 = vmatprep.subr.mxu0 0.0
  %809 = vmatpush1.msra.mxu0 0.0
  %810 = vmatprep.subr.mxu0 0.0
  %811 = vmatpush1.msra.mxu0 0.0
  %812 = vmatprep.subr.mxu0 0.0
  %813 = vmatpush1.msra.mxu0 0.0
  %814 = vmatprep.subr.mxu0 0.0
  %815 = vmatpush1.msra.mxu0 0.0
  %816 = vmatprep.subr.mxu0 0.0
  %817 = vmatpush1.msra.mxu0 0.0
  %818 = vmatprep.subr.mxu0 0.0
  %819 = vmatpush1.msra.mxu0 0.0
  %820 = vmatprep.subr.mxu0 0.0
  %821 = vmatpush1.msra.mxu0 0.0
  %822 = vmatprep.subr.mxu0 0.0
  %823 = vmatpush1.msra.mxu0 0.0
  %824 = vmatprep.subr.mxu0 0.0
  %825 = vmatpush1.msra.mxu0 0.0
  %826 = vmatprep.subr.mxu0 0.0
  %827 = vmatpush1.msra.mxu0 0.0
  %828 = vmatprep.subr.mxu0 0.0
  %829 = vmatpush1.msra.mxu0 0.0
  %830 = vmatprep.subr.mxu0 0.0
  %831 = vmatpush1.msra.mxu0 0.0
  %832 = vmatprep.subr.mxu0 0.0
  %833 = vmatpush1.msra.mxu0 0.0
  %834 = vmatprep.subr.mxu0 0.0
  %835 = vmatpush1.msra.mxu0 0.0
  %836 = vmatprep.subr.mxu0 0.0
  %837 = vmatpush1.msra.mxu0 0.0
  %838 = vmatprep.subr.mxu0 0.0
  %839 = vmatpush1.msra.mxu0 0.0
  %840 = vmatprep.subr.mxu0 0.0
  %841 = vmatpush1.msra.mxu0 0.0
  %842 = vmatprep.mubr.f32.mxu0 0.0
  %843 = vmatmul.mubr.f32.gmra.mrb[0].mxu0 %v65
  %v844 = vpop.f32.mrb[0].mxu0
  %v845 = vadd.f32 0.0, %v844
  %v846 = vpop.f32.mrb[0].mxu0
  %847 = vmatprep.mubr.f32.mxu0 0.0
  %848 = vmatmul.mubr.f32.gmra.mrb[0].mxu0 %v68
  %v849 = vpop.f32.mrb[0].mxu0
  %v850 = vadd.f32 0.0, %v849
  %v851 = vpop.f32.mrb[0].mxu0
  %852 = vmatprep.mubr.f32.mxu0 0.0
  %853 = vmatmul.mubr.f32.gmra.mrb[0].mxu0 %v71
  %v854 = vpop.f32.mrb[0].mxu0
  %v855 = vadd.f32 0.0, %v854
  %v856 = vpop.f32.mrb[0].mxu0
  %857 = vmatprep.mubr.f32.mxu0 0.0
  %858 = vmatmul.mubr.f32.gmra.mrb[0].mxu0 %v74
  %v859 = vpop.f32.mrb[0].mxu0
  %v860 = vadd.f32 0.0, %v859
  %v861 = vpop.f32.mrb[0].mxu0
  %862 = vdwg.mxu0
  %863 = vmatprep.subr.mxu0 0.0
  %864 = vmatpush1.msra.mxu0 %v774
  %865 = vmatprep.subr.mxu0 0.0
  %866 = vmatpush1.msra.mxu0 %v775
  %867 = vmatprep.subr.mxu0 0.0
  %868 = vmatpush1.msra.mxu0 %v776
  %869 = vmatprep.subr.mxu0 0.0
  %870 = vmatpush1.msra.mxu0 %v777
  %871 = vmatprep.subr.mxu0 0.0
  %872 = vmatpush1.msra.mxu0 0.0
  %873 = vmatprep.subr.mxu0 0.0
  %874 = vmatpush1.msra.mxu0 0.0
  %875 = vmatprep.subr.mxu0 0.0
  %876 = vmatpush1.msra.mxu0 0.0
  %877 = vmatprep.subr.mxu0 0.0
  %878 = vmatpush1.msra.mxu0 0.0
  %879 = vmatprep.subr.mxu0 0.0
  %880 = vmatpush1.msra.mxu0 0.0
  %881 = vmatprep.subr.mxu0 0.0
  %882 = vmatpush1.msra.mxu0 0.0
  %883 = vmatprep.subr.mxu0 0.0
  %884 = vmatpush1.msra.mxu0 0.0
  %885 = vmatprep.subr.mxu0 0.0
  %886 = vmatpush1.msra.mxu0 0.0
  %887 = vmatprep.subr.mxu0 0.0
  %888 = vmatpush1.msra.mxu0 0.0
  %889 = vmatprep.subr.mxu0 0.0
  %890 = vmatpush1.msra.mxu0 0.0
  %891 = vmatprep.subr.mxu0 0.0
  %892 = vmatpush1.msra.mxu0 0.0
  %893 = vmatprep.subr.mxu0 0.0
  %894 = vmatpush1.msra.mxu0 0.0
  %895 = vmatprep.subr.mxu0 0.0
  %896 = vmatpush1.msra.mxu0 0.0
  %897 = vmatprep.subr.mxu0 0.0
  %898 = vmatpush1.msra.mxu0 0.0
  %899 = vmatprep.subr.mxu0 0.0
  %900 = vmatpush1.msra.mxu0 0.0
  %901 = vmatprep.subr.mxu0 0.0
  %902 = vmatpush1.msra.mxu0 0.0
  %903 = vmatprep.subr.mxu0 0.0
  %904 = vmatpush1.msra.mxu0 0.0
  %905 = vmatprep.subr.mxu0 0.0
  %906 = vmatpush1.msra.mxu0 0.0
  %907 = vmatprep.subr.mxu0 0.0
  %908 = vmatpush1.msra.mxu0 0.0
  %909 = vmatprep.subr.mxu0 0.0
  %910 = vmatpush1.msra.mxu0 0.0
  %911 = vmatprep.subr.mxu0 0.0
  %912 = vmatpush1.msra.mxu0 0.0
  %913 = vmatprep.subr.mxu0 0.0
  %914 = vmatpush1.msra.mxu0 0.0
  %915 = vmatprep.subr.mxu0 0.0
  %916 = vmatpush1.msra.mxu0 0.0
  %917 = vmatprep.subr.mxu0 0.0
  %918 = vmatpush1.msra.mxu0 0.0
  %919 = vmatprep.subr.mxu0 0.0
  %920 = vmatpush1.msra.mxu0 0.0
  %921 = vmatprep.subr.mxu0 0.0
  %922 = vmatpush1.msra.mxu0 0.0
  %923 = vmatprep.subr.mxu0 0.0
  %924 = vmatpush1.msra.mxu0 0.0
  %925 = vmatprep.subr.mxu0 0.0
  %926 = vmatpush1.msra.mxu0 0.0
  %927 = vmatprep.mubr.f32.mxu0 0.0
  %928 = vmatmul.mubr.f32.gmra.mrb[0].mxu0 %v162
  %v929 = vpop.f32.mrb[0].mxu0
  %v930 = vadd.f32 0.0, %v929
  %v931 = vpop.f32.mrb[0].mxu0
  %932 = vmatprep.mubr.f32.mxu0 0.0
  %933 = vmatmul.mubr.f32.gmra.mrb[0].mxu0 %v165
  %v934 = vpop.f32.mrb[0].mxu0
  %v935 = vadd.f32 0.0, %v934
  %v936 = vpop.f32.mrb[0].mxu0
  %937 = vmatprep.mubr.f32.mxu0 0.0
  %938 = vmatmul.mubr.f32.gmra.mrb[0].mxu0 %v168
  %v939 = vpop.f32.mrb[0].mxu0
  %v940 = vadd.f32 0.0, %v939
  %v941 = vpop.f32.mrb[0].mxu0
  %942 = vmatprep.mubr.f32.mxu0 0.0
  %943 = vmatmul.mubr.f32.gmra.mrb[0].mxu0 %v171
  %v944 = vpop.f32.mrb[0].mxu0
  %v945 = vadd.f32 0.0, %v944
  %v946 = vpop.f32.mrb[0].mxu0
  %947 = vdwg.mxu0
  %v948 = vld [vmem:[%s4] sm:$0xff]
  %v949 = vld [vmem:[%s4 + $0x8] sm:$0xff]
  %v950 = vld [vmem:[%s4 + $0x10] sm:$0xff]
  %v951 = vld [vmem:[%s4 + $0x18] sm:$0xff]
  %v952 = vld [vmem:[%s4 + $0x20] sm:$0xff]
  %v953 = vld [vmem:[%s4 + $0x28] sm:$0xff]
  %v954 = vld [vmem:[%s4 + $0x30] sm:$0xff]
  %v955 = vld [vmem:[%s4 + $0x38] sm:$0xff]
  %v956 = vld [vmem:[%s4 + $0x40] sm:$0xff]
  %v957 = vld [vmem:[%s4 + $0x48] sm:$0xff]
  %v958 = vld [vmem:[%s4 + $0x50] sm:$0xff]
  %v959 = vld [vmem:[%s4 + $0x58] sm:$0xff]
  %v960 = vld [vmem:[%s4 + $0x60] sm:$0xff]
  %v961 = vld [vmem:[%s4 + $0x68] sm:$0xff]
  %v962 = vld [vmem:[%s4 + $0x70] sm:$0xff]
  %v963 = vld [vmem:[%s4 + $0x78] sm:$0xff]
  %s964 = scalar_lea.vmem %s4, 128
  %v965 = vld [vmem:[%s964] sm:$0xff]
  %v966 = vld [vmem:[%s964 + $0x8] sm:$0xff]
  %v967 = vld [vmem:[%s964 + $0x10] sm:$0xff]
  %v968 = vld [vmem:[%s964 + $0x18] sm:$0xff]
  %v969 = vld [vmem:[%s964 + $0x20] sm:$0xff]
  %v970 = vld [vmem:[%s964 + $0x28] sm:$0xff]
  %v971 = vld [vmem:[%s964 + $0x30] sm:$0xff]
  %v972 = vld [vmem:[%s964 + $0x38] sm:$0xff]
  %v973 = vld [vmem:[%s964 + $0x40] sm:$0xff]
  %v974 = vld [vmem:[%s964 + $0x48] sm:$0xff]
  %v975 = vld [vmem:[%s964 + $0x50] sm:$0xff]
  %v976 = vld [vmem:[%s964 + $0x58] sm:$0xff]
  %v977 = vld [vmem:[%s964 + $0x60] sm:$0xff]
  %v978 = vld [vmem:[%s964 + $0x68] sm:$0xff]
  %v979 = vld [vmem:[%s964 + $0x70] sm:$0xff]
  %v980 = vld [vmem:[%s964 + $0x78] sm:$0xff]
  %981 = vmatprep.subr.mxu0 0.0
  %982 = vmatpush1.msra.mxu0 %v965
  %983 = vmatprep.subr.mxu0 0.0
  %984 = vmatpush1.msra.mxu0 %v966
  %985 = vmatprep.subr.mxu0 0.0
  %986 = vmatpush1.msra.mxu0 %v967
  %987 = vmatprep.subr.mxu0 0.0
  %988 = vmatpush1.msra.mxu0 %v968
  %989 = vmatprep.subr.mxu0 0.0
  %990 = vmatpush1.msra.mxu0 %v969
  %991 = vmatprep.subr.mxu0 0.0
  %992 = vmatpush1.msra.mxu0 %v970
  %993 = vmatprep.subr.mxu0 0.0
  %994 = vmatpush1.msra.mxu0 %v971
  %995 = vmatprep.subr.mxu0 0.0
  %996 = vmatpush1.msra.mxu0 %v972
  %997 = vmatprep.subr.mxu0 0.0
  %998 = vmatpush1.msra.mxu0 %v973
  %999 = vmatprep.subr.mxu0 0.0
  %1000 = vmatpush1.msra.mxu0 %v974
  %1001 = vmatprep.subr.mxu0 0.0
  %1002 = vmatpush1.msra.mxu0 %v975
  %1003 = vmatprep.subr.mxu0 0.0
  %1004 = vmatpush1.msra.mxu0 %v976
  %1005 = vmatprep.subr.mxu0 0.0
  %1006 = vmatpush1.msra.mxu0 %v977
  %1007 = vmatprep.subr.mxu0 0.0
  %1008 = vmatpush1.msra.mxu0 %v978
  %1009 = vmatprep.subr.mxu0 0.0
  %1010 = vmatpush1.msra.mxu0 %v979
  %1011 = vmatprep.subr.mxu0 0.0
  %1012 = vmatpush1.msra.mxu0 %v980
  %1013 = vmatprep.subr.mxu0 0.0
  %1014 = vmatpush1.msra.mxu0 0.0
  %1015 = vmatprep.subr.mxu0 0.0
  %1016 = vmatpush1.msra.mxu0 0.0
  %1017 = vmatprep.subr.mxu0 0.0
  %1018 = vmatpush1.msra.mxu0 0.0
  %1019 = vmatprep.subr.mxu0 0.0
  %1020 = vmatpush1.msra.mxu0 0.0
  %1021 = vmatprep.subr.mxu0 0.0
  %1022 = vmatpush1.msra.mxu0 0.0
  %1023 = vmatprep.subr.mxu0 0.0
  %1024 = vmatpush1.msra.mxu0 0.0
  %1025 = vmatprep.subr.mxu0 0.0
  %1026 = vmatpush1.msra.mxu0 0.0
  %1027 = vmatprep.subr.mxu0 0.0
  %1028 = vmatpush1.msra.mxu0 0.0
  %1029 = vmatprep.subr.mxu0 0.0
  %1030 = vmatpush1.msra.mxu0 0.0
  %1031 = vmatprep.subr.mxu0 0.0
  %1032 = vmatpush1.msra.mxu0 0.0
  %1033 = vmatprep.subr.mxu0 0.0
  %1034 = vmatpush1.msra.mxu0 0.0
  %1035 = vmatprep.subr.mxu0 0.0
  %1036 = vmatpush1.msra.mxu0 0.0
  %1037 = vmatprep.subr.mxu0 0.0
  %1038 = vmatpush1.msra.mxu0 0.0
  %1039 = vmatprep.subr.mxu0 0.0
  %1040 = vmatpush1.msra.mxu0 0.0
  %1041 = vmatprep.subr.mxu0 0.0
  %1042 = vmatpush1.msra.mxu0 0.0
  %1043 = vmatprep.subr.mxu0 0.0
  %1044 = vmatpush1.msra.mxu0 0.0
  %1045 = vmatprep.mubr.f32.mxu0 0.0
  %1046 = vmatmul.mubr.f32.gmra.mrb[0].mxu0 %v774
  %v1047 = vpop.f32.mrb[0].mxu0
  %v1048 = vadd.f32 0.0, %v1047
  %v1049 = vpop.f32.mrb[0].mxu0
  %1050 = vmatprep.mubr.f32.mxu0 0.0
  %1051 = vmatmul.mubr.f32.gmra.mrb[0].mxu0 %v775
  %v1052 = vpop.f32.mrb[0].mxu0
  %v1053 = vadd.f32 0.0, %v1052
  %v1054 = vpop.f32.mrb[0].mxu0
  %1055 = vmatprep.mubr.f32.mxu0 0.0
  %1056 = vmatmul.mubr.f32.gmra.mrb[0].mxu0 %v776
  %v1057 = vpop.f32.mrb[0].mxu0
  %v1058 = vadd.f32 0.0, %v1057
  %v1059 = vpop.f32.mrb[0].mxu0
  %1060 = vmatprep.mubr.f32.mxu0 0.0
  %1061 = vmatmul.mubr.f32.gmra.mrb[0].mxu0 %v777
  %v1062 = vpop.f32.mrb[0].mxu0
  %v1063 = vadd.f32 0.0, %v1062
  %v1064 = vpop.f32.mrb[0].mxu0
  %1065 = vdwg.mxu0
  %1066 = vmatprep.subr.mxu0 0.0
  %1067 = vmatpush1.msra.mxu0 %v948
  %1068 = vmatprep.subr.mxu0 0.0
  %1069 = vmatpush1.msra.mxu0 %v949
  %1070 = vmatprep.subr.mxu0 0.0
  %1071 = vmatpush1.msra.mxu0 %v950
  %1072 = vmatprep.subr.mxu0 0.0
  %1073 = vmatpush1.msra.mxu0 %v951
  %1074 = vmatprep.subr.mxu0 0.0
  %1075 = vmatpush1.msra.mxu0 %v952
  %1076 = vmatprep.subr.mxu0 0.0
  %1077 = vmatpush1.msra.mxu0 %v953
  %1078 = vmatprep.subr.mxu0 0.0
  %1079 = vmatpush1.msra.mxu0 %v954
  %1080 = vmatprep.subr.mxu0 0.0
  %1081 = vmatpush1.msra.mxu0 %v955
  %1082 = vmatprep.subr.mxu0 0.0
  %1083 = vmatpush1.msra.mxu0 %v956
  %1084 = vmatprep.subr.mxu0 0.0
  %1085 = vmatpush1.msra.mxu0 %v957
  %1086 = vmatprep.subr.mxu0 0.0
  %1087 = vmatpush1.msra.mxu0 %v958
  %1088 = vmatprep.subr.mxu0 0.0
  %1089 = vmatpush1.msra.mxu0 %v959
  %1090 = vmatprep.subr.mxu0 0.0
  %1091 = vmatpush1.msra.mxu0 %v960
  %1092 = vmatprep.subr.mxu0 0.0
  %1093 = vmatpush1.msra.mxu0 %v961
  %1094 = vmatprep.subr.mxu0 0.0
  %1095 = vmatpush1.msra.mxu0 %v962
  %1096 = vmatprep.subr.mxu0 0.0
  %1097 = vmatpush1.msra.mxu0 %v963
  %1098 = vmatprep.subr.mxu0 0.0
  %1099 = vmatpush1.msra.mxu0 0.0
  %1100 = vmatprep.subr.mxu0 0.0
  %1101 = vmatpush1.msra.mxu0 0.0
  %1102 = vmatprep.subr.mxu0 0.0
  %1103 = vmatpush1.msra.mxu0 0.0
  %1104 = vmatprep.subr.mxu0 0.0
  %1105 = vmatpush1.msra.mxu0 0.0
  %1106 = vmatprep.subr.mxu0 0.0
  %1107 = vmatpush1.msra.mxu0 0.0
  %1108 = vmatprep.subr.mxu0 0.0
  %1109 = vmatpush1.msra.mxu0 0.0
  %1110 = vmatprep.subr.mxu0 0.0
  %1111 = vmatpush1.msra.mxu0 0.0
  %1112 = vmatprep.subr.mxu0 0.0
  %1113 = vmatpush1.msra.mxu0 0.0
  %1114 = vmatprep.subr.mxu0 0.0
  %1115 = vmatpush1.msra.mxu0 0.0
  %1116 = vmatprep.subr.mxu0 0.0
  %1117 = vmatpush1.msra.mxu0 0.0
  %1118 = vmatprep.subr.mxu0 0.0
  %1119 = vmatpush1.msra.mxu0 0.0
  %1120 = vmatprep.subr.mxu0 0.0
  %1121 = vmatpush1.msra.mxu0 0.0
  %1122 = vmatprep.subr.mxu0 0.0
  %1123 = vmatpush1.msra.mxu0 0.0
  %1124 = vmatprep.subr.mxu0 0.0
  %1125 = vmatpush1.msra.mxu0 0.0
  %1126 = vmatprep.subr.mxu0 0.0
  %1127 = vmatpush1.msra.mxu0 0.0
  %1128 = vmatprep.subr.mxu0 0.0
  %1129 = vmatpush1.msra.mxu0 0.0
  %1130 = vmatprep.mubr.f32.mxu0 0.0
  %1131 = vmatmul.mubr.f32.gmra.mrb[0].mxu0 %v845
  %v1132 = vpop.f32.mrb[0].mxu0
  %v1133 = vadd.f32 %v1048, %v1132
  %v1134 = vpop.f32.mrb[0].mxu0
  %1135 = vmatprep.mubr.f32.mxu0 0.0
  %1136 = vmatmul.mubr.f32.gmra.mrb[0].mxu0 %v850
  %v1137 = vpop.f32.mrb[0].mxu0
  %v1138 = vadd.f32 %v1053, %v1137
  %v1139 = vpop.f32.mrb[0].mxu0
  %1140 = vmatprep.mubr.f32.mxu0 0.0
  %1141 = vmatmul.mubr.f32.gmra.mrb[0].mxu0 %v855
  %v1142 = vpop.f32.mrb[0].mxu0
  %v1143 = vadd.f32 %v1058, %v1142
  %v1144 = vpop.f32.mrb[0].mxu0
  %1145 = vmatprep.mubr.f32.mxu0 0.0
  %1146 = vmatmul.mubr.f32.gmra.mrb[0].mxu0 %v860
  %v1147 = vpop.f32.mrb[0].mxu0
  %v1148 = vadd.f32 %v1063, %v1147
  %v1149 = vpop.f32.mrb[0].mxu0
  %1150 = vdwg.mxu0
  %s1151 = scalar_lea.vmem %s4, 256
  %v1152 = vld [vmem:[%s1151] sm:$0xff]
  %v1153 = vld [vmem:[%s1151 + $0x8] sm:$0xff]
  %v1154 = vld [vmem:[%s1151 + $0x10] sm:$0xff]
  %v1155 = vld [vmem:[%s1151 + $0x18] sm:$0xff]
  %v1156 = vld [vmem:[%s1151 + $0x20] sm:$0xff]
  %v1157 = vld [vmem:[%s1151 + $0x28] sm:$0xff]
  %v1158 = vld [vmem:[%s1151 + $0x30] sm:$0xff]
  %v1159 = vld [vmem:[%s1151 + $0x38] sm:$0xff]
  %v1160 = vld [vmem:[%s1151 + $0x40] sm:$0xff]
  %v1161 = vld [vmem:[%s1151 + $0x48] sm:$0xff]
  %v1162 = vld [vmem:[%s1151 + $0x50] sm:$0xff]
  %v1163 = vld [vmem:[%s1151 + $0x58] sm:$0xff]
  %v1164 = vld [vmem:[%s1151 + $0x60] sm:$0xff]
  %v1165 = vld [vmem:[%s1151 + $0x68] sm:$0xff]
  %v1166 = vld [vmem:[%s1151 + $0x70] sm:$0xff]
  %v1167 = vld [vmem:[%s1151 + $0x78] sm:$0xff]
  %1168 = vmatprep.subr.mxu0 0.0
  %1169 = vmatpush1.msra.mxu0 %v1152
  %1170 = vmatprep.subr.mxu0 0.0
  %1171 = vmatpush1.msra.mxu0 %v1153
  %1172 = vmatprep.subr.mxu0 0.0
  %1173 = vmatpush1.msra.mxu0 %v1154
  %1174 = vmatprep.subr.mxu0 0.0
  %1175 = vmatpush1.msra.mxu0 %v1155
  %1176 = vmatprep.subr.mxu0 0.0
  %1177 = vmatpush1.msra.mxu0 %v1156
  %1178 = vmatprep.subr.mxu0 0.0
  %1179 = vmatpush1.msra.mxu0 %v1157
  %1180 = vmatprep.subr.mxu0 0.0
  %1181 = vmatpush1.msra.mxu0 %v1158
  %1182 = vmatprep.subr.mxu0 0.0
  %1183 = vmatpush1.msra.mxu0 %v1159
  %1184 = vmatprep.subr.mxu0 0.0
  %1185 = vmatpush1.msra.mxu0 %v1160
  %1186 = vmatprep.subr.mxu0 0.0
  %1187 = vmatpush1.msra.mxu0 %v1161
  %1188 = vmatprep.subr.mxu0 0.0
  %1189 = vmatpush1.msra.mxu0 %v1162
  %1190 = vmatprep.subr.mxu0 0.0
  %1191 = vmatpush1.msra.mxu0 %v1163
  %1192 = vmatprep.subr.mxu0 0.0
  %1193 = vmatpush1.msra.mxu0 %v1164
  %1194 = vmatprep.subr.mxu0 0.0
  %1195 = vmatpush1.msra.mxu0 %v1165
  %1196 = vmatprep.subr.mxu0 0.0
  %1197 = vmatpush1.msra.mxu0 %v1166
  %1198 = vmatprep.subr.mxu0 0.0
  %1199 = vmatpush1.msra.mxu0 %v1167
  %1200 = vmatprep.subr.mxu0 0.0
  %1201 = vmatpush1.msra.mxu0 0.0
  %1202 = vmatprep.subr.mxu0 0.0
  %1203 = vmatpush1.msra.mxu0 0.0
  %1204 = vmatprep.subr.mxu0 0.0
  %1205 = vmatpush1.msra.mxu0 0.0
  %1206 = vmatprep.subr.mxu0 0.0
  %1207 = vmatpush1.msra.mxu0 0.0
  %1208 = vmatprep.subr.mxu0 0.0
  %1209 = vmatpush1.msra.mxu0 0.0
  %1210 = vmatprep.subr.mxu0 0.0
  %1211 = vmatpush1.msra.mxu0 0.0
  %1212 = vmatprep.subr.mxu0 0.0
  %1213 = vmatpush1.msra.mxu0 0.0
  %1214 = vmatprep.subr.mxu0 0.0
  %1215 = vmatpush1.msra.mxu0 0.0
  %1216 = vmatprep.subr.mxu0 0.0
  %1217 = vmatpush1.msra.mxu0 0.0
  %1218 = vmatprep.subr.mxu0 0.0
  %1219 = vmatpush1.msra.mxu0 0.0
  %1220 = vmatprep.subr.mxu0 0.0
  %1221 = vmatpush1.msra.mxu0 0.0
  %1222 = vmatprep.subr.mxu0 0.0
  %1223 = vmatpush1.msra.mxu0 0.0
  %1224 = vmatprep.subr.mxu0 0.0
  %1225 = vmatpush1.msra.mxu0 0.0
  %1226 = vmatprep.subr.mxu0 0.0
  %1227 = vmatpush1.msra.mxu0 0.0
  %1228 = vmatprep.subr.mxu0 0.0
  %1229 = vmatpush1.msra.mxu0 0.0
  %1230 = vmatprep.subr.mxu0 0.0
  %1231 = vmatpush1.msra.mxu0 0.0
  %1232 = vmatprep.mubr.f32.mxu0 0.0
  %1233 = vmatmul.mubr.f32.gmra.mrb[0].mxu0 %v930
  %v1234 = vpop.f32.mrb[0].mxu0
  %v1235 = vadd.f32 0.0, %v1234
  %v1236 = vpop.f32.mrb[0].mxu0
  %1237 = vmatprep.mubr.f32.mxu0 0.0
  %1238 = vmatmul.mubr.f32.gmra.mrb[0].mxu0 %v935
  %v1239 = vpop.f32.mrb[0].mxu0
  %v1240 = vadd.f32 0.0, %v1239
  %v1241 = vpop.f32.mrb[0].mxu0
  %1242 = vmatprep.mubr.f32.mxu0 0.0
  %1243 = vmatmul.mubr.f32.gmra.mrb[0].mxu0 %v940
  %v1244 = vpop.f32.mrb[0].mxu0
  %v1245 = vadd.f32 0.0, %v1244
  %v1246 = vpop.f32.mrb[0].mxu0
  %1247 = vmatprep.mubr.f32.mxu0 0.0
  %1248 = vmatmul.mubr.f32.gmra.mrb[0].mxu0 %v945
  %v1249 = vpop.f32.mrb[0].mxu0
  %v1250 = vadd.f32 0.0, %v1249
  %v1251 = vpop.f32.mrb[0].mxu0
  %1252 = vdwg.mxu0
  %v1253 = vadd.f32 %v1133, %v1235
  %v1254 = vadd.f32 %v1138, %v1240
  %v1255 = vadd.f32 %v1143, %v1245
  %v1256 = vadd.f32 %v1148, %v1250
  %v1257 = vadd.f32 %v1253, %v1254
  %v1258 = vadd.f32 %v1257, %v1255
  %v1259 = vadd.f32 %v1258, %v1256
  %v1260 = vrot.slane %v1259, 4
  %v1261 = vadd.f32 %v1259, %v1260
  %v1262 = vrot.slane %v1261, 2
  %v1263 = vadd.f32 %v1261, %v1262
  %v1264 = vrot.slane %v1263, 1
  %v1265 = vadd.f32 %v1263, %v1264
  %v1266 = vmul.f32 %v1253, %v1253
  %v1267 = vmul.f32 %v1254, %v1254
  %v1268 = vmul.f32 %v1255, %v1255
  %v1269 = vmul.f32 %v1256, %v1256
  %v1270 = vadd.f32 %v1266, %v1267
  %v1271 = vadd.f32 %v1270, %v1268
  %v1272 = vadd.f32 %v1271, %v1269
  %v1273 = vrot.slane %v1272, 4
  %v1274 = vadd.f32 %v1272, %v1273
  %v1275 = vrot.slane %v1274, 2
  %v1276 = vadd.f32 %v1274, %v1275
  %v1277 = vrot.slane %v1276, 1
  %v1278 = vadd.f32 %v1276, %v1277
  %1279 = vmatprep.subr.mxu0 0.0
  %1280 = vmatpush1.msra.mxu0 %v47
  %1281 = vmatprep.subr.mxu0 0.0
  %1282 = vmatpush1.msra.mxu0 %v48
  %1283 = vmatprep.subr.mxu0 0.0
  %1284 = vmatpush1.msra.mxu0 %v49
  %1285 = vmatprep.subr.mxu0 0.0
  %1286 = vmatpush1.msra.mxu0 %v50
  %1287 = vmatprep.subr.mxu0 0.0
  %1288 = vmatpush1.msra.mxu0 %v51
  %1289 = vmatprep.subr.mxu0 0.0
  %1290 = vmatpush1.msra.mxu0 %v52
  %1291 = vmatprep.subr.mxu0 0.0
  %1292 = vmatpush1.msra.mxu0 %v53
  %1293 = vmatprep.subr.mxu0 0.0
  %1294 = vmatpush1.msra.mxu0 %v54
  %1295 = vmatprep.subr.mxu0 0.0
  %1296 = vmatpush1.msra.mxu0 %v55
  %1297 = vmatprep.subr.mxu0 0.0
  %1298 = vmatpush1.msra.mxu0 %v56
  %1299 = vmatprep.subr.mxu0 0.0
  %1300 = vmatpush1.msra.mxu0 %v57
  %1301 = vmatprep.subr.mxu0 0.0
  %1302 = vmatpush1.msra.mxu0 %v58
  %1303 = vmatprep.subr.mxu0 0.0
  %1304 = vmatpush1.msra.mxu0 %v59
  %1305 = vmatprep.subr.mxu0 0.0
  %1306 = vmatpush1.msra.mxu0 %v60
  %1307 = vmatprep.subr.mxu0 0.0
  %1308 = vmatpush1.msra.mxu0 %v61
  %1309 = vmatprep.subr.mxu0 0.0
  %1310 = vmatpush1.msra.mxu0 %v62
  %1311 = vmatprep.subr.mxu0 0.0
  %1312 = vmatpush1.msra.mxu0 0.0
  %1313 = vmatprep.subr.mxu0 0.0
  %1314 = vmatpush1.msra.mxu0 0.0
  %1315 = vmatprep.subr.mxu0 0.0
  %1316 = vmatpush1.msra.mxu0 0.0
  %1317 = vmatprep.subr.mxu0 0.0
  %1318 = vmatpush1.msra.mxu0 0.0
  %1319 = vmatprep.subr.mxu0 0.0
  %1320 = vmatpush1.msra.mxu0 0.0
  %1321 = vmatprep.subr.mxu0 0.0
  %1322 = vmatpush1.msra.mxu0 0.0
  %1323 = vmatprep.subr.mxu0 0.0
  %1324 = vmatpush1.msra.mxu0 0.0
  %1325 = vmatprep.subr.mxu0 0.0
  %1326 = vmatpush1.msra.mxu0 0.0
  %1327 = vmatprep.subr.mxu0 0.0
  %1328 = vmatpush1.msra.mxu0 0.0
  %1329 = vmatprep.subr.mxu0 0.0
  %1330 = vmatpush1.msra.mxu0 0.0
  %1331 = vmatprep.subr.mxu0 0.0
  %1332 = vmatpush1.msra.mxu0 0.0
  %1333 = vmatprep.subr.mxu0 0.0
  %1334 = vmatpush1.msra.mxu0 0.0
  %1335 = vmatprep.subr.mxu0 0.0
  %1336 = vmatpush1.msra.mxu0 0.0
  %1337 = vmatprep.subr.mxu0 0.0
  %1338 = vmatpush1.msra.mxu0 0.0
  %1339 = vmatprep.subr.mxu0 0.0
  %1340 = vmatpush1.msra.mxu0 0.0
  %1341 = vmatprep.subr.mxu0 0.0
  %1342 = vmatpush1.msra.mxu0 0.0
  %1343 = vmatprep.mubr.f32.mxu0 0.0
  %1344 = vmatmul.mubr.f32.gmra.mrb[0].mxu0 %v1265
  %v1345 = vpop.f32.mrb[0].mxu0
  %v1346 = vadd.f32 0.0, %v1345
  %v1347 = vpop.f32.mrb[0].mxu0
  %1348 = vdwg.mxu0
  %1349 = vmatprep.subr.mxu0 0.0
  %1350 = vmatpush1.msra.mxu0 %v47
  %1351 = vmatprep.subr.mxu0 0.0
  %1352 = vmatpush1.msra.mxu0 %v48
  %1353 = vmatprep.subr.mxu0 0.0
  %1354 = vmatpush1.msra.mxu0 %v49
  %1355 = vmatprep.subr.mxu0 0.0
  %1356 = vmatpush1.msra.mxu0 %v50
  %1357 = vmatprep.subr.mxu0 0.0
  %1358 = vmatpush1.msra.mxu0 %v51
  %1359 = vmatprep.subr.mxu0 0.0
  %1360 = vmatpush1.msra.mxu0 %v52
  %1361 = vmatprep.subr.mxu0 0.0
  %1362 = vmatpush1.msra.mxu0 %v53
  %1363 = vmatprep.subr.mxu0 0.0
  %1364 = vmatpush1.msra.mxu0 %v54
  %1365 = vmatprep.subr.mxu0 0.0
  %1366 = vmatpush1.msra.mxu0 %v55
  %1367 = vmatprep.subr.mxu0 0.0
  %1368 = vmatpush1.msra.mxu0 %v56
  %1369 = vmatprep.subr.mxu0 0.0
  %1370 = vmatpush1.msra.mxu0 %v57
  %1371 = vmatprep.subr.mxu0 0.0
  %1372 = vmatpush1.msra.mxu0 %v58
  %1373 = vmatprep.subr.mxu0 0.0
  %1374 = vmatpush1.msra.mxu0 %v59
  %1375 = vmatprep.subr.mxu0 0.0
  %1376 = vmatpush1.msra.mxu0 %v60
  %1377 = vmatprep.subr.mxu0 0.0
  %1378 = vmatpush1.msra.mxu0 %v61
  %1379 = vmatprep.subr.mxu0 0.0
  %1380 = vmatpush1.msra.mxu0 %v62
  %1381 = vmatprep.subr.mxu0 0.0
  %1382 = vmatpush1.msra.mxu0 0.0
  %1383 = vmatprep.subr.mxu0 0.0
  %1384 = vmatpush1.msra.mxu0 0.0
  %1385 = vmatprep.subr.mxu0 0.0
  %1386 = vmatpush1.msra.mxu0 0.0
  %1387 = vmatprep.subr.mxu0 0.0
  %1388 = vmatpush1.msra.mxu0 0.0
  %1389 = vmatprep.subr.mxu0 0.0
  %1390 = vmatpush1.msra.mxu0 0.0
  %1391 = vmatprep.subr.mxu0 0.0
  %1392 = vmatpush1.msra.mxu0 0.0
  %1393 = vmatprep.subr.mxu0 0.0
  %1394 = vmatpush1.msra.mxu0 0.0
  %1395 = vmatprep.subr.mxu0 0.0
  %1396 = vmatpush1.msra.mxu0 0.0
  %1397 = vmatprep.subr.mxu0 0.0
  %1398 = vmatpush1.msra.mxu0 0.0
  %1399 = vmatprep.subr.mxu0 0.0
  %1400 = vmatpush1.msra.mxu0 0.0
  %1401 = vmatprep.subr.mxu0 0.0
  %1402 = vmatpush1.msra.mxu0 0.0
  %1403 = vmatprep.subr.mxu0 0.0
  %1404 = vmatpush1.msra.mxu0 0.0
  %1405 = vmatprep.subr.mxu0 0.0
  %1406 = vmatpush1.msra.mxu0 0.0
  %1407 = vmatprep.subr.mxu0 0.0
  %1408 = vmatpush1.msra.mxu0 0.0
  %1409 = vmatprep.subr.mxu0 0.0
  %1410 = vmatpush1.msra.mxu0 0.0
  %1411 = vmatprep.subr.mxu0 0.0
  %1412 = vmatpush1.msra.mxu0 0.0
  %1413 = vmatprep.mubr.f32.mxu0 0.0
  %1414 = vmatmul.mubr.f32.gmra.mrb[0].mxu0 %v1278
  %v1415 = vpop.f32.mrb[0].mxu0
  %v1416 = vadd.f32 0.0, %v1415
  %v1417 = vpop.f32.mrb[0].mxu0
  %1418 = vdwg.mxu0
  %v1419 = vmul.f32 %v1346, 0.001953125
  %v1420 = vmul.f32 %v1416, 0.001953125
  %v1421 = vmul.f32 %v1419, %v1419
  %v1422 = vsub.f32 %v1420, %v1421
  %v1423 = vmax.f32 %v1422, 0.0
  %v1424 = vlaneseq
  %v1425 = vshrl.u32 %v1424, 7
  %v1426 = vsub.s32 0, %v1425
  %v1427 = vrot.slane %v1419, %v1426
  %v1428 = vsub.f32 %v1253, %v1427
  %v1429 = vsub.f32 %v1254, %v1427
  %v1430 = vsub.f32 %v1255, %v1427
  %v1431 = vsub.f32 %v1256, %v1427
  %v1432 = vadd.f32 %v1423, 1e-05
  %v1433 = vrsqrt.pop %v1432
  %v1434 = vlaneseq
  %v1435 = vshrl.u32 %v1434, 7
  %v1436 = vsub.s32 0, %v1435
  %v1437 = vrot.slane %v1433, %v1436
  %v1438 = vmul.f32 %v1428, %v1437
  %v1439 = vmul.f32 %v1429, %v1437
  %v1440 = vmul.f32 %v1430, %v1437
  %v1441 = vmul.f32 %v1431, %v1437
  %v1442 = vld [vmem:[%s8] sm:$0x1]
  %v1444 = vlaneseq
  %v1445 = vshrl.u32 %v1444, 7
  %v1446 = vsub.s32 0, %v1445
  %v1447 = vrot.slane %v1442, %v1446
  %v1449 = vmul.f32 %v1438, %v1447
  %v1450 = vmul.f32 %v1439, %v1447
  %v1451 = vmul.f32 %v1440, %v1447
  %v1452 = vmul.f32 %v1441, %v1447
  %v1453 = vld [vmem:[%s9] sm:$0x1]
  %v1455 = vlaneseq
  %v1456 = vshrl.u32 %v1455, 7
  %v1457 = vsub.s32 0, %v1456
  %v1458 = vrot.slane %v1453, %v1457
  %v1460 = vadd.f32 %v1449, %v1458
  %v1461 = vadd.f32 %v1450, %v1458
  %v1462 = vadd.f32 %v1451, %v1458
  %v1463 = vadd.f32 %v1452, %v1458
  %v1464 = vadd.f32 %v1460, %v35
  %v1465 = vadd.f32 %v1461, %v36
  %v1466 = vadd.f32 %v1462, %v37
  %v1467 = vadd.f32 %v1463, %v38
  %v1468 = vmax.f32 %v1464, 0.0
  %v1469 = vmax.f32 %v1465, 0.0
  %v1470 = vmax.f32 %v1466, 0.0
  %v1471 = vmax.f32 %v1467, 0.0
  %1472 = vst [vmem:[%s10] sm:$0xff] %v1468
  %1473 = vst [vmem:[%s10 + $0x8] sm:$0xff] %v1469
  %1474 = vst [vmem:[%s10 + $0x10] sm:$0xff] %v1470
  %1475 = vst [vmem:[%s10 + $0x18] sm:$0xff] %v1471
  // Predicated region
  $region42: #{de_basic_block.1} parent=0 // pred_check
    _
  $region43: #{de_basic_block.1} parent=0 // pred_check_branch
    %1477 = sbr.rel (0) target = $region45
  $region44: #{de_basic_block.1} parent=0 // pred_region
    _
  $region45: #{de_basic_block.1} parent=0 // pred_fallthru
    _
  // Predicated region
  $region46: #{de_basic_block.1} parent=0 // pred_check
    _
  $region47: #{de_basic_block.1} parent=0 // pred_check_branch
    %1479 = sbr.rel (0) target = $region49
  $region48: #{de_basic_block.1} parent=0 // pred_region
    _
  $region49: #{de_basic_block.1} parent=0 // pred_fallthru
    _

</llo_original>
